<compile_context>
chip_gen: v7x
topology: tpu7x:2x2x1
jax: 0.10.0
libtpu: 0.0.40
codegen_flags: <defaults>
</compile_context>

<pallas_src>
import functools

import numpy as np
import jax
import jax.numpy as jnp
from jax import lax
from jax.experimental import pallas as pl
from jax.experimental.pallas import tpu as pltpu


NEG_SLOPE = 0.01   # PyTorch nn.LeakyReLU default
BN_EPS = 1e-5


# ----------------------------------------------------------------------------
# Fused kernel (built per shape/config via a small factory closure)
# ----------------------------------------------------------------------------
def _make_branch_kernel(H, W, cins, couts, activation):
    Lp = (H + 2) * (W + 2)     # padded-flat spatial length (lane axis)
    MARGIN = W + 3             # max |tap offset| in the padded-flat layout
    nl = len(cins)
    # flat offset of tap (kh, kw) relative to the output position
    deltas = [(kh - 1) * (W + 2) + (kw - 1)
              for kh in range(3) for kw in range(3)]

    def kernel(*refs):
        # refs: x, mask, (w, scale, bias) * nl, out, wide_scratch, patch_scratch
        x_ref, mask_ref = refs[0], refs[1]
        layer_refs = refs[2:2 + 3 * nl]
        o_ref = refs[2 + 3 * nl]
        wide_ref, patch_ref = refs[3 + 3 * nl], refs[4 + 3 * nl]

        mask = mask_ref[...]                      # (1, Lp): 1 interior, 0 pad border
        wide_ref[...] = jnp.zeros_like(wide_ref)  # zero halo margins (and stale rows)

        y = x_ref[0].astype(jnp.float32)          # (cin0, Lp) padded-flat, zero border
        for l in range(nl):
            cin, cout = cins[l], couts[l]
            w_ref, s_ref, b_ref = layer_refs[3 * l:3 * l + 3]

            # stage this layer's padded-flat input between the zero margins
            wide_ref[:cin, MARGIN:MARGIN + Lp] = y

            # im2col: 9 statically shifted copies stacked along the sublane axis
            for t, d in enumerate(deltas):
                patch_ref[t * cin:(t + 1) * cin, :] = (
                    wide_ref[:cin, MARGIN + d:MARGIN + d + Lp])

            # one MXU matmul per layer, bf16 operands, f32 accumulation
            patches = patch_ref[:9 * cin, :].astype(jnp.bfloat16)   # (9*cin, Lp)
            w = w_ref[...].astype(jnp.bfloat16)                     # (cout, 9*cin)
            y = jnp.dot(w, patches, preferred_element_type=jnp.float32)  # (cout, Lp)

            y = y * s_ref[...] + b_ref[...]            # folded BatchNorm (inference)
            y = jnp.where(y >= 0, y, NEG_SLOPE * y)    # LeakyReLU
            y = y * mask                               # re-zero the pad border

        if activation:
            # softmax over channels == sublane axis of the (Cout, Lp) tile
            m = jnp.max(y, axis=0, keepdims=True)
            e = jnp.exp(y - m)
            # NOTE: pl.reciprocal(approx=True) would move the divide to the (idle)
            # EUP, but the exact divide on a (1, Lp) denominator is negligible here
            # and preserves the tight validation margin.
            y = e / jnp.sum(e, axis=0, keepdims=True)

        o_ref[0] = y.astype(o_ref.dtype)

    return kernel


# ----------------------------------------------------------------------------
# Wrapper
# ----------------------------------------------------------------------------
@functools.partial(jax.jit, static_argnames=("activation",))
def branch_forward(x_nchw, params, activation=True):
    """Fused Pallas implementation of Branch.forward. Input / output in NCHW."""
    N, C0, H, W = x_nchw.shape
    Lp = (H + 2) * (W + 2)
    MARGIN = W + 3

    # Boundary glue (single tiny XLA ops): pad once, flatten to padded-flat layout.
    xp = jnp.pad(x_nchw, ((0, 0), (0, 0), (1, 1), (1, 1)))
    xp = xp.reshape(N, C0, Lp).astype(jnp.float32)

    mask2d = np.zeros((H + 2, W + 2), np.float32)
    mask2d[1:H + 1, 1:W + 1] = 1.0
    mask = jnp.asarray(mask2d.reshape(1, Lp))

    cins, couts = [], []
    flat_inputs = [xp, mask]
    in_specs = [
        pl.BlockSpec((1, C0, Lp), lambda n: (n, 0, 0)),
        pl.BlockSpec((1, Lp), lambda n: (0, 0)),
    ]
    for (w_oihw, scale, bias) in params:
        cout, cin = int(w_oihw.shape[0]), int(w_oihw.shape[1])
        cins.append(cin)
        couts.append(cout)
        # (Cout, Cin, 3, 3) -> (Cout, (kh, kw, Cin)) to match the patch-row order
        w_mat = jnp.transpose(w_oihw, (0, 2, 3, 1)).reshape(cout, 9 * cin)
        flat_inputs += [w_mat.astype(jnp.float32),
                        scale.reshape(cout, 1).astype(jnp.float32),
                        bias.reshape(cout, 1).astype(jnp.float32)]
        in_specs += [pl.BlockSpec((cout, 9 * cin), lambda n: (0, 0)),
                     pl.BlockSpec((cout, 1), lambda n: (0, 0)),
                     pl.BlockSpec((cout, 1), lambda n: (0, 0))]

    kernel = _make_branch_kernel(H, W, tuple(cins), tuple(couts), activation)
    c_last = couts[-1]
    cin_max = max(cins)

    out_flat = pl.pallas_call(
        kernel,
        out_shape=jax.ShapeDtypeStruct((N, c_last, Lp), jnp.float32),
        grid=(N,),
        in_specs=in_specs,
        out_specs=pl.BlockSpec((1, c_last, Lp), lambda n: (n, 0, 0)),
        scratch_shapes=[
            pltpu.VMEM((cin_max, Lp + 2 * MARGIN), jnp.float32),  # zero-margin halo buf
            pltpu.VMEM((9 * cin_max, Lp), jnp.float32),           # im2col patch matrix
        ],
        compiler_params=pltpu.CompilerParams(
            dimension_semantics=("parallel",)),  # one image per TensorCore on v7x
    )(*flat_inputs)

    # drop the pad border (boundary glue, one tiny slice)
    return out_flat.reshape(N, c_last, H + 2, W + 2)[:, :, 1:H + 1, 1:W + 1]


# ----------------------------------------------------------------------------
# Parameter init (deterministic, mimics the module's shapes; inference-mode BN)
# ----------------------------------------------------------------------------
def init_branch_params(key, in_channel, out_channel, repeat=3):
    params = []
    for i in range(repeat):
        cout = out_channel if i == repeat - 1 else in_channel
        cin = in_channel   # every conv in the PyTorch module reads `in_channel`
        key, kw, kg, kb = jax.random.split(key, 4)
        bound = 1.0 / float(np.sqrt(cin * 9))
        w_oihw = jax.random.uniform(kw, (cout, cin, 3, 3), jnp.float32, -bound, bound)
        gamma = 1.0 + 0.1 * jax.random.normal(kg, (cout,), jnp.float32)
        beta = 0.1 * jax.random.normal(kb, (cout,), jnp.float32)
        run_mean = jnp.zeros((cout,), jnp.float32)
        run_var = jnp.ones((cout,), jnp.float32)
        scale = gamma / jnp.sqrt(run_var + BN_EPS)
        bias = beta - run_mean * scale
        params.append((w_oihw, scale, bias))
    return params


# Pure-JAX reference (XLA conv). Conv operands rounded to bf16 exactly like the
# kernel's single-pass MXU path (f32 accumulation), so the comparison is tight.
def branch_reference(x_nchw, params, activation=True):
    y = x_nchw.astype(jnp.float32)
    for (w_oihw, scale, bias) in params:
        y = lax.conv_general_dilated(
            y.astype(jnp.bfloat16), w_oihw.astype(jnp.bfloat16),
            window_strides=(1, 1), padding="SAME",
            dimension_numbers=("NCHW", "OIHW", "NCHW"),
            preferred_element_type=jnp.float32)
        y = y * scale[None, :, None, None] + bias[None, :, None, None]
        y = jnp.where(y >= 0, y, NEG_SLOPE * y)
    if activation:
        y = jax.nn.softmax(y, axis=1)
    return y


if __name__ == "__main__":
    key = jax.random.PRNGKey(0)
    in_channel, out_channel = 4, 8
    N, H, W = 2, 16, 16

    kx, kp = jax.random.split(key)
    x = jax.random.normal(kx, (N, in_channel, H, W), jnp.float32)  # NCHW input
    params = init_branch_params(kp, in_channel, out_channel, repeat=3)

    out = branch_forward(x, params, activation=True)
    out = jax.block_until_ready(out)

    ref = branch_reference(x, params, activation=True)
    assert out.shape == (N, out_channel, H, W), out.shape
    max_err = float(jnp.max(jnp.abs(out - ref)))
    assert jnp.allclose(out, ref, atol=1e-3, rtol=1e-3), max_err
    assert jnp.allclose(jnp.sum(out, axis=1), 1.0, atol=1e-4), "softmax norm"

    print("KERNEL_OK")
</pallas_src>

<mosaic_0001>
module attributes {stable_mosaic.version = 11 : i64} {
  func.func @kernel(%arg0: i32, %arg1: memref<1x4x324xf32, #tpu.memory_space<vmem>>, %arg2: memref<1x324xf32, #tpu.memory_space<vmem>>, %arg3: memref<4x36xf32, #tpu.memory_space<vmem>>, %arg4: memref<4x1xf32, #tpu.memory_space<vmem>>, %arg5: memref<4x1xf32, #tpu.memory_space<vmem>>, %arg6: memref<4x36xf32, #tpu.memory_space<vmem>>, %arg7: memref<4x1xf32, #tpu.memory_space<vmem>>, %arg8: memref<4x1xf32, #tpu.memory_space<vmem>>, %arg9: memref<8x36xf32, #tpu.memory_space<vmem>>, %arg10: memref<8x1xf32, #tpu.memory_space<vmem>>, %arg11: memref<8x1xf32, #tpu.memory_space<vmem>>, %arg12: memref<1x8x324xf32, #tpu.memory_space<vmem>>, %arg13: memref<4x362xf32, #tpu.memory_space<vmem>>, %arg14: memref<36x324xf32, #tpu.memory_space<vmem>>) attributes {dimension_semantics = [#tpu.dimension_semantics<parallel>], iteration_bounds = array<i64: 2>, scalar_prefetch = 0 : i64, scratch_operands = 2 : i64, tpu.core_type = #tpu.core_type<tc>, window_params = [{transform_indices = @transform_0, window_bounds = array<i64: 1, 4, 324>}, {pipeline_mode = #tpu.pipeline_mode<synchronous>, transform_indices = @transform_1, window_bounds = array<i64: 1, 324>}, {pipeline_mode = #tpu.pipeline_mode<synchronous>, transform_indices = @transform_2, window_bounds = array<i64: 4, 36>}, {pipeline_mode = #tpu.pipeline_mode<synchronous>, transform_indices = @transform_3, window_bounds = array<i64: 4, 1>}, {pipeline_mode = #tpu.pipeline_mode<synchronous>, transform_indices = @transform_4, window_bounds = array<i64: 4, 1>}, {pipeline_mode = #tpu.pipeline_mode<synchronous>, transform_indices = @transform_5, window_bounds = array<i64: 4, 36>}, {pipeline_mode = #tpu.pipeline_mode<synchronous>, transform_indices = @transform_6, window_bounds = array<i64: 4, 1>}, {pipeline_mode = #tpu.pipeline_mode<synchronous>, transform_indices = @transform_7, window_bounds = array<i64: 4, 1>}, {pipeline_mode = #tpu.pipeline_mode<synchronous>, transform_indices = @transform_8, window_bounds = array<i64: 8, 36>}, {pipeline_mode = #tpu.pipeline_mode<synchronous>, transform_indices = @transform_9, window_bounds = array<i64: 8, 1>}, {pipeline_mode = #tpu.pipeline_mode<synchronous>, transform_indices = @transform_10, window_bounds = array<i64: 8, 1>}, {transform_indices = @transform_11, window_bounds = array<i64: 1, 8, 324>}]} {
    %c0 = arith.constant 0 : index
    %c0_0 = arith.constant 0 : index
    %0 = vector.load %arg2[%c0, %c0_0] : memref<1x324xf32, #tpu.memory_space<vmem>>, vector<1x324xf32>
    %cst = arith.constant 0.000000e+00 : f32
    %1 = vector.broadcast %cst : f32 to vector<4x362xf32>
    %c0_1 = arith.constant 0 : index
    %c0_2 = arith.constant 0 : index
    %2 = vector.load %arg13[%c0_1, %c0_2] : memref<4x362xf32, #tpu.memory_space<vmem>>, vector<4x362xf32>
    tpu.vector_store %arg13[%c0_1, %c0_2], %1 {strides = array<i32>} : memref<4x362xf32, #tpu.memory_space<vmem>>, vector<4x362xf32>,
    %c0_3 = arith.constant 0 : index
    %c0_4 = arith.constant 0 : index
    %c0_5 = arith.constant 0 : index
    %3 = vector.load %arg1[%c0_3, %c0_4, %c0_5] : memref<1x4x324xf32, #tpu.memory_space<vmem>>, vector<1x4x324xf32>
    %4 = vector.shape_cast %3 : vector<1x4x324xf32> to vector<4x324xf32>
    %c0_6 = arith.constant 0 : index
    %c19 = arith.constant 19 : index
    %5 = vector.load %arg13[%c0_6, %c19] : memref<4x362xf32, #tpu.memory_space<vmem>>, vector<4x324xf32>
    tpu.vector_store %arg13[%c0_6, %c19], %4 {strides = array<i32>} : memref<4x362xf32, #tpu.memory_space<vmem>>, vector<4x324xf32>,
    %c0_7 = arith.constant 0 : index
    %c0_8 = arith.constant 0 : index
    %6 = vector.load %arg13[%c0_7, %c0_8] : memref<4x362xf32, #tpu.memory_space<vmem>>, vector<4x324xf32>
    %c0_9 = arith.constant 0 : index
    %c0_10 = arith.constant 0 : index
    %7 = vector.load %arg14[%c0_9, %c0_10] : memref<36x324xf32, #tpu.memory_space<vmem>>, vector<4x324xf32>
    tpu.vector_store %arg14[%c0_9, %c0_10], %6 {strides = array<i32>} : memref<36x324xf32, #tpu.memory_space<vmem>>, vector<4x324xf32>,
    %c0_11 = arith.constant 0 : index
    %c1 = arith.constant 1 : index
    %8 = vector.load %arg13[%c0_11, %c1] : memref<4x362xf32, #tpu.memory_space<vmem>>, vector<4x324xf32>
    %c4 = arith.constant 4 : index
    %c0_12 = arith.constant 0 : index
    %9 = vector.load %arg14[%c4, %c0_12] : memref<36x324xf32, #tpu.memory_space<vmem>>, vector<4x324xf32>
    tpu.vector_store %arg14[%c4, %c0_12], %8 {strides = array<i32>} : memref<36x324xf32, #tpu.memory_space<vmem>>, vector<4x324xf32>,
    %c0_13 = arith.constant 0 : index
    %c2 = arith.constant 2 : index
    %10 = vector.load %arg13[%c0_13, %c2] : memref<4x362xf32, #tpu.memory_space<vmem>>, vector<4x324xf32>
    %c8 = arith.constant 8 : index
    %c0_14 = arith.constant 0 : index
    %11 = vector.load %arg14[%c8, %c0_14] : memref<36x324xf32, #tpu.memory_space<vmem>>, vector<4x324xf32>
    tpu.vector_store %arg14[%c8, %c0_14], %10 {strides = array<i32>} : memref<36x324xf32, #tpu.memory_space<vmem>>, vector<4x324xf32>,
    %c0_15 = arith.constant 0 : index
    %c18 = arith.constant 18 : index
    %12 = vector.load %arg13[%c0_15, %c18] : memref<4x362xf32, #tpu.memory_space<vmem>>, vector<4x324xf32>
    %c12 = arith.constant 12 : index
    %c0_16 = arith.constant 0 : index
    %13 = vector.load %arg14[%c12, %c0_16] : memref<36x324xf32, #tpu.memory_space<vmem>>, vector<4x324xf32>
    tpu.vector_store %arg14[%c12, %c0_16], %12 {strides = array<i32>} : memref<36x324xf32, #tpu.memory_space<vmem>>, vector<4x324xf32>,
    %c0_17 = arith.constant 0 : index
    %c19_18 = arith.constant 19 : index
    %14 = vector.load %arg13[%c0_17, %c19_18] : memref<4x362xf32, #tpu.memory_space<vmem>>, vector<4x324xf32>
    %c16 = arith.constant 16 : index
    %c0_19 = arith.constant 0 : index
    %15 = vector.load %arg14[%c16, %c0_19] : memref<36x324xf32, #tpu.memory_space<vmem>>, vector<4x324xf32>
    tpu.vector_store %arg14[%c16, %c0_19], %14 {strides = array<i32>} : memref<36x324xf32, #tpu.memory_space<vmem>>, vector<4x324xf32>,
    %c0_20 = arith.constant 0 : index
    %c20 = arith.constant 20 : index
    %16 = vector.load %arg13[%c0_20, %c20] : memref<4x362xf32, #tpu.memory_space<vmem>>, vector<4x324xf32>
    %c20_21 = arith.constant 20 : index
    %c0_22 = arith.constant 0 : index
    %17 = vector.load %arg14[%c20_21, %c0_22] : memref<36x324xf32, #tpu.memory_space<vmem>>, vector<4x324xf32>
    tpu.vector_store %arg14[%c20_21, %c0_22], %16 {strides = array<i32>} : memref<36x324xf32, #tpu.memory_space<vmem>>, vector<4x324xf32>,
    %c0_23 = arith.constant 0 : index
    %c36 = arith.constant 36 : index
    %18 = vector.load %arg13[%c0_23, %c36] : memref<4x362xf32, #tpu.memory_space<vmem>>, vector<4x324xf32>
    %c24 = arith.constant 24 : index
    %c0_24 = arith.constant 0 : index
    %19 = vector.load %arg14[%c24, %c0_24] : memref<36x324xf32, #tpu.memory_space<vmem>>, vector<4x324xf32>
    tpu.vector_store %arg14[%c24, %c0_24], %18 {strides = array<i32>} : memref<36x324xf32, #tpu.memory_space<vmem>>, vector<4x324xf32>,
    %c0_25 = arith.constant 0 : index
    %c37 = arith.constant 37 : index
    %20 = vector.load %arg13[%c0_25, %c37] : memref<4x362xf32, #tpu.memory_space<vmem>>, vector<4x324xf32>
    %c28 = arith.constant 28 : index
    %c0_26 = arith.constant 0 : index
    %21 = vector.load %arg14[%c28, %c0_26] : memref<36x324xf32, #tpu.memory_space<vmem>>, vector<4x324xf32>
    tpu.vector_store %arg14[%c28, %c0_26], %20 {strides = array<i32>} : memref<36x324xf32, #tpu.memory_space<vmem>>, vector<4x324xf32>,
    %c0_27 = arith.constant 0 : index
    %c38 = arith.constant 38 : index
    %22 = vector.load %arg13[%c0_27, %c38] : memref<4x362xf32, #tpu.memory_space<vmem>>, vector<4x324xf32>
    %c32 = arith.constant 32 : index
    %c0_28 = arith.constant 0 : index
    %23 = vector.load %arg14[%c32, %c0_28] : memref<36x324xf32, #tpu.memory_space<vmem>>, vector<4x324xf32>
    tpu.vector_store %arg14[%c32, %c0_28], %22 {strides = array<i32>} : memref<36x324xf32, #tpu.memory_space<vmem>>, vector<4x324xf32>,
    %c0_29 = arith.constant 0 : index
    %c0_30 = arith.constant 0 : index
    %24 = vector.load %arg14[%c0_29, %c0_30] : memref<36x324xf32, #tpu.memory_space<vmem>>, vector<36x324xf32>
    %25 = arith.truncf %24 : vector<36x324xf32> to vector<36x324xbf16>
    %c0_31 = arith.constant 0 : index
    %c0_32 = arith.constant 0 : index
    %26 = vector.load %arg3[%c0_31, %c0_32] : memref<4x36xf32, #tpu.memory_space<vmem>>, vector<4x36xf32>
    %27 = arith.truncf %26 : vector<4x36xf32> to vector<4x36xbf16>
    %cst_33 = arith.constant dense<0.000000e+00> : vector<4x324xf32>
    %28 = tpu.matmul %27, %25, %cst_33 {dimension_numbers = #tpu.dot_dimension_numbers<[1], [0], [0], [1], [0, 0, 1, 1], [], []>} : vector<4x36xbf16>, vector<36x324xbf16>, vector<4x324xf32> -> vector<4x324xf32>
    %c0_34 = arith.constant 0 : index
    %c0_35 = arith.constant 0 : index
    %29 = vector.load %arg4[%c0_34, %c0_35] : memref<4x1xf32, #tpu.memory_space<vmem>>, vector<4x1xf32>
    %30 = vector.broadcast %29 : vector<4x1xf32> to vector<4x324xf32>
    %31 = arith.mulf %28, %30 : vector<4x324xf32>
    %c0_36 = arith.constant 0 : index
    %c0_37 = arith.constant 0 : index
    %32 = vector.load %arg5[%c0_36, %c0_37] : memref<4x1xf32, #tpu.memory_space<vmem>>, vector<4x1xf32>
    %33 = vector.broadcast %32 : vector<4x1xf32> to vector<4x324xf32>
    %34 = arith.addf %31, %33 : vector<4x324xf32>
    %cst_38 = arith.constant 0.000000e+00 : f32
    %35 = vector.broadcast %cst_38 : f32 to vector<4x324xf32>
    %36 = arith.cmpf oge, %34, %35 : vector<4x324xf32>
    %cst_39 = arith.constant 0.00999999977 : f32
    %37 = vector.broadcast %cst_39 : f32 to vector<4x324xf32>
    %38 = arith.mulf %37, %34 : vector<4x324xf32>
    %39 = arith.select %36, %34, %38 : vector<4x324xi1>, vector<4x324xf32>
    %40 = vector.broadcast %0 : vector<1x324xf32> to vector<4x324xf32>
    %41 = arith.mulf %39, %40 : vector<4x324xf32>
    %c0_40 = arith.constant 0 : index
    %c19_41 = arith.constant 19 : index
    %42 = vector.load %arg13[%c0_40, %c19_41] : memref<4x362xf32, #tpu.memory_space<vmem>>, vector<4x324xf32>
    tpu.vector_store %arg13[%c0_40, %c19_41], %41 {strides = array<i32>} : memref<4x362xf32, #tpu.memory_space<vmem>>, vector<4x324xf32>,
    %c0_42 = arith.constant 0 : index
    %c0_43 = arith.constant 0 : index
    %43 = vector.load %arg13[%c0_42, %c0_43] : memref<4x362xf32, #tpu.memory_space<vmem>>, vector<4x324xf32>
    %c0_44 = arith.constant 0 : index
    %c0_45 = arith.constant 0 : index
    %44 = vector.load %arg14[%c0_44, %c0_45] : memref<36x324xf32, #tpu.memory_space<vmem>>, vector<4x324xf32>
    tpu.vector_store %arg14[%c0_44, %c0_45], %43 {strides = array<i32>} : memref<36x324xf32, #tpu.memory_space<vmem>>, vector<4x324xf32>,
    %c0_46 = arith.constant 0 : index
    %c1_47 = arith.constant 1 : index
    %45 = vector.load %arg13[%c0_46, %c1_47] : memref<4x362xf32, #tpu.memory_space<vmem>>, vector<4x324xf32>
    %c4_48 = arith.constant 4 : index
    %c0_49 = arith.constant 0 : index
    %46 = vector.load %arg14[%c4_48, %c0_49] : memref<36x324xf32, #tpu.memory_space<vmem>>, vector<4x324xf32>
    tpu.vector_store %arg14[%c4_48, %c0_49], %45 {strides = array<i32>} : memref<36x324xf32, #tpu.memory_space<vmem>>, vector<4x324xf32>,
    %c0_50 = arith.constant 0 : index
    %c2_51 = arith.constant 2 : index
    %47 = vector.load %arg13[%c0_50, %c2_51] : memref<4x362xf32, #tpu.memory_space<vmem>>, vector<4x324xf32>
    %c8_52 = arith.constant 8 : index
    %c0_53 = arith.constant 0 : index
    %48 = vector.load %arg14[%c8_52, %c0_53] : memref<36x324xf32, #tpu.memory_space<vmem>>, vector<4x324xf32>
    tpu.vector_store %arg14[%c8_52, %c0_53], %47 {strides = array<i32>} : memref<36x324xf32, #tpu.memory_space<vmem>>, vector<4x324xf32>,
    %c0_54 = arith.constant 0 : index
    %c18_55 = arith.constant 18 : index
    %49 = vector.load %arg13[%c0_54, %c18_55] : memref<4x362xf32, #tpu.memory_space<vmem>>, vector<4x324xf32>
    %c12_56 = arith.constant 12 : index
    %c0_57 = arith.constant 0 : index
    %50 = vector.load %arg14[%c12_56, %c0_57] : memref<36x324xf32, #tpu.memory_space<vmem>>, vector<4x324xf32>
    tpu.vector_store %arg14[%c12_56, %c0_57], %49 {strides = array<i32>} : memref<36x324xf32, #tpu.memory_space<vmem>>, vector<4x324xf32>,
    %c0_58 = arith.constant 0 : index
    %c19_59 = arith.constant 19 : index
    %51 = vector.load %arg13[%c0_58, %c19_59] : memref<4x362xf32, #tpu.memory_space<vmem>>, vector<4x324xf32>
    %c16_60 = arith.constant 16 : index
    %c0_61 = arith.constant 0 : index
    %52 = vector.load %arg14[%c16_60, %c0_61] : memref<36x324xf32, #tpu.memory_space<vmem>>, vector<4x324xf32>
    tpu.vector_store %arg14[%c16_60, %c0_61], %51 {strides = array<i32>} : memref<36x324xf32, #tpu.memory_space<vmem>>, vector<4x324xf32>,
    %c0_62 = arith.constant 0 : index
    %c20_63 = arith.constant 20 : index
    %53 = vector.load %arg13[%c0_62, %c20_63] : memref<4x362xf32, #tpu.memory_space<vmem>>, vector<4x324xf32>
    %c20_64 = arith.constant 20 : index
    %c0_65 = arith.constant 0 : index
    %54 = vector.load %arg14[%c20_64, %c0_65] : memref<36x324xf32, #tpu.memory_space<vmem>>, vector<4x324xf32>
    tpu.vector_store %arg14[%c20_64, %c0_65], %53 {strides = array<i32>} : memref<36x324xf32, #tpu.memory_space<vmem>>, vector<4x324xf32>,
    %c0_66 = arith.constant 0 : index
    %c36_67 = arith.constant 36 : index
    %55 = vector.load %arg13[%c0_66, %c36_67] : memref<4x362xf32, #tpu.memory_space<vmem>>, vector<4x324xf32>
    %c24_68 = arith.constant 24 : index
    %c0_69 = arith.constant 0 : index
    %56 = vector.load %arg14[%c24_68, %c0_69] : memref<36x324xf32, #tpu.memory_space<vmem>>, vector<4x324xf32>
    tpu.vector_store %arg14[%c24_68, %c0_69], %55 {strides = array<i32>} : memref<36x324xf32, #tpu.memory_space<vmem>>, vector<4x324xf32>,
    %c0_70 = arith.constant 0 : index
    %c37_71 = arith.constant 37 : index
    %57 = vector.load %arg13[%c0_70, %c37_71] : memref<4x362xf32, #tpu.memory_space<vmem>>, vector<4x324xf32>
    %c28_72 = arith.constant 28 : index
    %c0_73 = arith.constant 0 : index
    %58 = vector.load %arg14[%c28_72, %c0_73] : memref<36x324xf32, #tpu.memory_space<vmem>>, vector<4x324xf32>
    tpu.vector_store %arg14[%c28_72, %c0_73], %57 {strides = array<i32>} : memref<36x324xf32, #tpu.memory_space<vmem>>, vector<4x324xf32>,
    %c0_74 = arith.constant 0 : index
    %c38_75 = arith.constant 38 : index
    %59 = vector.load %arg13[%c0_74, %c38_75] : memref<4x362xf32, #tpu.memory_space<vmem>>, vector<4x324xf32>
    %c32_76 = arith.constant 32 : index
    %c0_77 = arith.constant 0 : index
    %60 = vector.load %arg14[%c32_76, %c0_77] : memref<36x324xf32, #tpu.memory_space<vmem>>, vector<4x324xf32>
    tpu.vector_store %arg14[%c32_76, %c0_77], %59 {strides = array<i32>} : memref<36x324xf32, #tpu.memory_space<vmem>>, vector<4x324xf32>,
    %c0_78 = arith.constant 0 : index
    %c0_79 = arith.constant 0 : index
    %61 = vector.load %arg14[%c0_78, %c0_79] : memref<36x324xf32, #tpu.memory_space<vmem>>, vector<36x324xf32>
    %62 = arith.truncf %61 : vector<36x324xf32> to vector<36x324xbf16>
    %c0_80 = arith.constant 0 : index
    %c0_81 = arith.constant 0 : index
    %63 = vector.load %arg6[%c0_80, %c0_81] : memref<4x36xf32, #tpu.memory_space<vmem>>, vector<4x36xf32>
    %64 = arith.truncf %63 : vector<4x36xf32> to vector<4x36xbf16>
    %cst_82 = arith.constant dense<0.000000e+00> : vector<4x324xf32>
    %65 = tpu.matmul %64, %62, %cst_82 {dimension_numbers = #tpu.dot_dimension_numbers<[1], [0], [0], [1], [0, 0, 1, 1], [], []>} : vector<4x36xbf16>, vector<36x324xbf16>, vector<4x324xf32> -> vector<4x324xf32>
    %c0_83 = arith.constant 0 : index
    %c0_84 = arith.constant 0 : index
    %66 = vector.load %arg7[%c0_83, %c0_84] : memref<4x1xf32, #tpu.memory_space<vmem>>, vector<4x1xf32>
    %67 = vector.broadcast %66 : vector<4x1xf32> to vector<4x324xf32>
    %68 = arith.mulf %65, %67 : vector<4x324xf32>
    %c0_85 = arith.constant 0 : index
    %c0_86 = arith.constant 0 : index
    %69 = vector.load %arg8[%c0_85, %c0_86] : memref<4x1xf32, #tpu.memory_space<vmem>>, vector<4x1xf32>
    %70 = vector.broadcast %69 : vector<4x1xf32> to vector<4x324xf32>
    %71 = arith.addf %68, %70 : vector<4x324xf32>
    %cst_87 = arith.constant 0.000000e+00 : f32
    %72 = vector.broadcast %cst_87 : f32 to vector<4x324xf32>
    %73 = arith.cmpf oge, %71, %72 : vector<4x324xf32>
    %cst_88 = arith.constant 0.00999999977 : f32
    %74 = vector.broadcast %cst_88 : f32 to vector<4x324xf32>
    %75 = arith.mulf %74, %71 : vector<4x324xf32>
    %76 = arith.select %73, %71, %75 : vector<4x324xi1>, vector<4x324xf32>
    %77 = vector.broadcast %0 : vector<1x324xf32> to vector<4x324xf32>
    %78 = arith.mulf %76, %77 : vector<4x324xf32>
    %c0_89 = arith.constant 0 : index
    %c19_90 = arith.constant 19 : index
    %79 = vector.load %arg13[%c0_89, %c19_90] : memref<4x362xf32, #tpu.memory_space<vmem>>, vector<4x324xf32>
    tpu.vector_store %arg13[%c0_89, %c19_90], %78 {strides = array<i32>} : memref<4x362xf32, #tpu.memory_space<vmem>>, vector<4x324xf32>,
    %c0_91 = arith.constant 0 : index
    %c0_92 = arith.constant 0 : index
    %80 = vector.load %arg13[%c0_91, %c0_92] : memref<4x362xf32, #tpu.memory_space<vmem>>, vector<4x324xf32>
    %c0_93 = arith.constant 0 : index
    %c0_94 = arith.constant 0 : index
    %81 = vector.load %arg14[%c0_93, %c0_94] : memref<36x324xf32, #tpu.memory_space<vmem>>, vector<4x324xf32>
    tpu.vector_store %arg14[%c0_93, %c0_94], %80 {strides = array<i32>} : memref<36x324xf32, #tpu.memory_space<vmem>>, vector<4x324xf32>,
    %c0_95 = arith.constant 0 : index
    %c1_96 = arith.constant 1 : index
    %82 = vector.load %arg13[%c0_95, %c1_96] : memref<4x362xf32, #tpu.memory_space<vmem>>, vector<4x324xf32>
    %c4_97 = arith.constant 4 : index
    %c0_98 = arith.constant 0 : index
    %83 = vector.load %arg14[%c4_97, %c0_98] : memref<36x324xf32, #tpu.memory_space<vmem>>, vector<4x324xf32>
    tpu.vector_store %arg14[%c4_97, %c0_98], %82 {strides = array<i32>} : memref<36x324xf32, #tpu.memory_space<vmem>>, vector<4x324xf32>,
    %c0_99 = arith.constant 0 : index
    %c2_100 = arith.constant 2 : index
    %84 = vector.load %arg13[%c0_99, %c2_100] : memref<4x362xf32, #tpu.memory_space<vmem>>, vector<4x324xf32>
    %c8_101 = arith.constant 8 : index
    %c0_102 = arith.constant 0 : index
    %85 = vector.load %arg14[%c8_101, %c0_102] : memref<36x324xf32, #tpu.memory_space<vmem>>, vector<4x324xf32>
    tpu.vector_store %arg14[%c8_101, %c0_102], %84 {strides = array<i32>} : memref<36x324xf32, #tpu.memory_space<vmem>>, vector<4x324xf32>,
    %c0_103 = arith.constant 0 : index
    %c18_104 = arith.constant 18 : index
    %86 = vector.load %arg13[%c0_103, %c18_104] : memref<4x362xf32, #tpu.memory_space<vmem>>, vector<4x324xf32>
    %c12_105 = arith.constant 12 : index
    %c0_106 = arith.constant 0 : index
    %87 = vector.load %arg14[%c12_105, %c0_106] : memref<36x324xf32, #tpu.memory_space<vmem>>, vector<4x324xf32>
    tpu.vector_store %arg14[%c12_105, %c0_106], %86 {strides = array<i32>} : memref<36x324xf32, #tpu.memory_space<vmem>>, vector<4x324xf32>,
    %c0_107 = arith.constant 0 : index
    %c19_108 = arith.constant 19 : index
    %88 = vector.load %arg13[%c0_107, %c19_108] : memref<4x362xf32, #tpu.memory_space<vmem>>, vector<4x324xf32>
    %c16_109 = arith.constant 16 : index
    %c0_110 = arith.constant 0 : index
    %89 = vector.load %arg14[%c16_109, %c0_110] : memref<36x324xf32, #tpu.memory_space<vmem>>, vector<4x324xf32>
    tpu.vector_store %arg14[%c16_109, %c0_110], %88 {strides = array<i32>} : memref<36x324xf32, #tpu.memory_space<vmem>>, vector<4x324xf32>,
    %c0_111 = arith.constant 0 : index
    %c20_112 = arith.constant 20 : index
    %90 = vector.load %arg13[%c0_111, %c20_112] : memref<4x362xf32, #tpu.memory_space<vmem>>, vector<4x324xf32>
    %c20_113 = arith.constant 20 : index
    %c0_114 = arith.constant 0 : index
    %91 = vector.load %arg14[%c20_113, %c0_114] : memref<36x324xf32, #tpu.memory_space<vmem>>, vector<4x324xf32>
    tpu.vector_store %arg14[%c20_113, %c0_114], %90 {strides = array<i32>} : memref<36x324xf32, #tpu.memory_space<vmem>>, vector<4x324xf32>,
    %c0_115 = arith.constant 0 : index
    %c36_116 = arith.constant 36 : index
    %92 = vector.load %arg13[%c0_115, %c36_116] : memref<4x362xf32, #tpu.memory_space<vmem>>, vector<4x324xf32>
    %c24_117 = arith.constant 24 : index
    %c0_118 = arith.constant 0 : index
    %93 = vector.load %arg14[%c24_117, %c0_118] : memref<36x324xf32, #tpu.memory_space<vmem>>, vector<4x324xf32>
    tpu.vector_store %arg14[%c24_117, %c0_118], %92 {strides = array<i32>} : memref<36x324xf32, #tpu.memory_space<vmem>>, vector<4x324xf32>,
    %c0_119 = arith.constant 0 : index
    %c37_120 = arith.constant 37 : index
    %94 = vector.load %arg13[%c0_119, %c37_120] : memref<4x362xf32, #tpu.memory_space<vmem>>, vector<4x324xf32>
    %c28_121 = arith.constant 28 : index
    %c0_122 = arith.constant 0 : index
    %95 = vector.load %arg14[%c28_121, %c0_122] : memref<36x324xf32, #tpu.memory_space<vmem>>, vector<4x324xf32>
    tpu.vector_store %arg14[%c28_121, %c0_122], %94 {strides = array<i32>} : memref<36x324xf32, #tpu.memory_space<vmem>>, vector<4x324xf32>,
    %c0_123 = arith.constant 0 : index
    %c38_124 = arith.constant 38 : index
    %96 = vector.load %arg13[%c0_123, %c38_124] : memref<4x362xf32, #tpu.memory_space<vmem>>, vector<4x324xf32>
    %c32_125 = arith.constant 32 : index
    %c0_126 = arith.constant 0 : index
    %97 = vector.load %arg14[%c32_125, %c0_126] : memref<36x324xf32, #tpu.memory_space<vmem>>, vector<4x324xf32>
    tpu.vector_store %arg14[%c32_125, %c0_126], %96 {strides = array<i32>} : memref<36x324xf32, #tpu.memory_space<vmem>>, vector<4x324xf32>,
    %c0_127 = arith.constant 0 : index
    %c0_128 = arith.constant 0 : index
    %98 = vector.load %arg14[%c0_127, %c0_128] : memref<36x324xf32, #tpu.memory_space<vmem>>, vector<36x324xf32>
    %99 = arith.truncf %98 : vector<36x324xf32> to vector<36x324xbf16>
    %c0_129 = arith.constant 0 : index
    %c0_130 = arith.constant 0 : index
    %100 = vector.load %arg9[%c0_129, %c0_130] : memref<8x36xf32, #tpu.memory_space<vmem>>, vector<8x36xf32>
    %101 = arith.truncf %100 : vector<8x36xf32> to vector<8x36xbf16>
    %cst_131 = arith.constant dense<0.000000e+00> : vector<8x324xf32>
    %102 = tpu.matmul %101, %99, %cst_131 {dimension_numbers = #tpu.dot_dimension_numbers<[1], [0], [0], [1], [0, 0, 1, 1], [], []>} : vector<8x36xbf16>, vector<36x324xbf16>, vector<8x324xf32> -> vector<8x324xf32>
    %c0_132 = arith.constant 0 : index
    %c0_133 = arith.constant 0 : index
    %103 = vector.load %arg10[%c0_132, %c0_133] : memref<8x1xf32, #tpu.memory_space<vmem>>, vector<8x1xf32>
    %104 = vector.broadcast %103 : vector<8x1xf32> to vector<8x324xf32>
    %105 = arith.mulf %102, %104 : vector<8x324xf32>
    %c0_134 = arith.constant 0 : index
    %c0_135 = arith.constant 0 : index
    %106 = vector.load %arg11[%c0_134, %c0_135] : memref<8x1xf32, #tpu.memory_space<vmem>>, vector<8x1xf32>
    %107 = vector.broadcast %106 : vector<8x1xf32> to vector<8x324xf32>
    %108 = arith.addf %105, %107 : vector<8x324xf32>
    %cst_136 = arith.constant 0.000000e+00 : f32
    %109 = vector.broadcast %cst_136 : f32 to vector<8x324xf32>
    %110 = arith.cmpf oge, %108, %109 : vector<8x324xf32>
    %cst_137 = arith.constant 0.00999999977 : f32
    %111 = vector.broadcast %cst_137 : f32 to vector<8x324xf32>
    %112 = arith.mulf %111, %108 : vector<8x324xf32>
    %113 = arith.select %110, %108, %112 : vector<8x324xi1>, vector<8x324xf32>
    %114 = vector.broadcast %0 : vector<1x324xf32> to vector<8x324xf32>
    %115 = arith.mulf %113, %114 : vector<8x324xf32>
    %cst_138 = arith.constant dense<0xFF800000> : vector<324xf32>
    %116 = vector.multi_reduction <maximumf>, %115, %cst_138 [0] : vector<8x324xf32> to vector<324xf32>
    %117 = vector.shape_cast %116 : vector<324xf32> to vector<1x324xf32>
    %118 = vector.broadcast %117 : vector<1x324xf32> to vector<8x324xf32>
    %119 = arith.subf %115, %118 : vector<8x324xf32>
    %120 = math.exp %119 : vector<8x324xf32>
    %cst_139 = arith.constant dense<0.000000e+00> : vector<324xf32>
    %121 = vector.multi_reduction <add>, %120, %cst_139 [0] : vector<8x324xf32> to vector<324xf32>
    %122 = vector.shape_cast %121 : vector<324xf32> to vector<1x324xf32>
    %123 = vector.broadcast %122 : vector<1x324xf32> to vector<8x324xf32>
    %124 = arith.divf %120, %123 : vector<8x324xf32>
    %c0_140 = arith.constant 0 : index
    %c0_141 = arith.constant 0 : index
    %c0_142 = arith.constant 0 : index
    %125 = vector.load %arg12[%c0_140, %c0_141, %c0_142] : memref<1x8x324xf32, #tpu.memory_space<vmem>>, vector<1x8x324xf32>
    %126 = vector.shape_cast %125 : vector<1x8x324xf32> to vector<8x324xf32>
    %127 = vector.shape_cast %124 : vector<8x324xf32> to vector<1x8x324xf32>
    tpu.vector_store %arg12[%c0_140, %c0_141, %c0_142], %127 {strides = array<i32>} : memref<1x8x324xf32, #tpu.memory_space<vmem>>, vector<1x8x324xf32>,
    return
  }
  func.func @transform_0(%arg0: i32) -> (i32, i32, i32) {
    %c0_i32 = arith.constant 0 : i32
    %c0_i32_0 = arith.constant 0 : i32
    %c0_i32_1 = arith.constant 0 : i32
    return %arg0, %c0_i32, %c0_i32_0 : i32, i32, i32
  }
  func.func @transform_1(%arg0: i32) -> (i32, i32) {
    %c0_i32 = arith.constant 0 : i32
    %c0_i32_0 = arith.constant 0 : i32
    %c0_i32_1 = arith.constant 0 : i32
    return %c0_i32, %c0_i32_0 : i32, i32
  }
  func.func @transform_2(%arg0: i32) -> (i32, i32) {
    %c0_i32 = arith.constant 0 : i32
    %c0_i32_0 = arith.constant 0 : i32
    %c0_i32_1 = arith.constant 0 : i32
    return %c0_i32, %c0_i32_0 : i32, i32
  }
  func.func @transform_3(%arg0: i32) -> (i32, i32) {
    %c0_i32 = arith.constant 0 : i32
    %c0_i32_0 = arith.constant 0 : i32
    %c0_i32_1 = arith.constant 0 : i32
    return %c0_i32, %c0_i32_0 : i32, i32
  }
  func.func @transform_4(%arg0: i32) -> (i32, i32) {
    %c0_i32 = arith.constant 0 : i32
    %c0_i32_0 = arith.constant 0 : i32
    %c0_i32_1 = arith.constant 0 : i32
    return %c0_i32, %c0_i32_0 : i32, i32
  }
  func.func @transform_5(%arg0: i32) -> (i32, i32) {
    %c0_i32 = arith.constant 0 : i32
    %c0_i32_0 = arith.constant 0 : i32
    %c0_i32_1 = arith.constant 0 : i32
    return %c0_i32, %c0_i32_0 : i32, i32
  }
  func.func @transform_6(%arg0: i32) -> (i32, i32) {
    %c0_i32 = arith.constant 0 : i32
    %c0_i32_0 = arith.constant 0 : i32
    %c0_i32_1 = arith.constant 0 : i32
    return %c0_i32, %c0_i32_0 : i32, i32
  }
  func.func @transform_7(%arg0: i32) -> (i32, i32) {
    %c0_i32 = arith.constant 0 : i32
    %c0_i32_0 = arith.constant 0 : i32
    %c0_i32_1 = arith.constant 0 : i32
    return %c0_i32, %c0_i32_0 : i32, i32
  }
  func.func @transform_8(%arg0: i32) -> (i32, i32) {
    %c0_i32 = arith.constant 0 : i32
    %c0_i32_0 = arith.constant 0 : i32
    %c0_i32_1 = arith.constant 0 : i32
    return %c0_i32, %c0_i32_0 : i32, i32
  }
  func.func @transform_9(%arg0: i32) -> (i32, i32) {
    %c0_i32 = arith.constant 0 : i32
    %c0_i32_0 = arith.constant 0 : i32
    %c0_i32_1 = arith.constant 0 : i32
    return %c0_i32, %c0_i32_0 : i32, i32
  }
  func.func @transform_10(%arg0: i32) -> (i32, i32) {
    %c0_i32 = arith.constant 0 : i32
    %c0_i32_0 = arith.constant 0 : i32
    %c0_i32_1 = arith.constant 0 : i32
    return %c0_i32, %c0_i32_0 : i32, i32
  }
  func.func @transform_11(%arg0: i32) -> (i32, i32, i32) {
    %c0_i32 = arith.constant 0 : i32
    %c0_i32_0 = arith.constant 0 : i32
    %c0_i32_1 = arith.constant 0 : i32
    return %arg0, %c0_i32, %c0_i32_0 : i32, i32, i32
  }
}

</mosaic_0001>

<llo_original>
// kernel: branch_forward.1
$region0: #{branch_forward.1}
  #allocation0 [shape = 'u32[]', space=smem, size = 0x4, offset = 0x4, fixed_abs, tag = 'smem constant byte address 0x4 - core index']
  #allocation1 [shape = 'u32[144,128]{1,0:T(1,128)}', space=vmem, size = 0x12000, scoped, tag = 'internal scratch']
  #allocation2 [shape = 'f32[4,362]{1,0:T(4,128)}', space=vmem, size = 0x1800, scoped, tag = 'scratch operand']
  #allocation3 [shape = 'f32[36,324]{1,0:T(8,128)}', space=vmem, size = 0xf000, scoped, tag = 'scratch operand']
  %s0 = inlined_call_operand.vmem [shape: f32[2,4,324], index: 0, kind: input, shape index: {}]
  %s1 = inlined_call_operand.vmem [shape: f32[1,324], index: 1, kind: input, shape index: {}]
  %s2 = inlined_call_operand.vmem [shape: f32[4,36], index: 2, kind: input, shape index: {}]
  %s3 = inlined_call_operand.vmem [shape: f32[4,1], index: 3, kind: input, shape index: {}]
  %s4 = inlined_call_operand.vmem [shape: f32[4,1], index: 4, kind: input, shape index: {}]
  %s5 = inlined_call_operand.vmem [shape: f32[4,36], index: 5, kind: input, shape index: {}]
  %s6 = inlined_call_operand.vmem [shape: f32[4,1], index: 6, kind: input, shape index: {}]
  %s7 = inlined_call_operand.vmem [shape: f32[4,1], index: 7, kind: input, shape index: {}]
  %s8 = inlined_call_operand.vmem [shape: f32[8,36], index: 8, kind: input, shape index: {}]
  %s9 = inlined_call_operand.vmem [shape: f32[8,1], index: 9, kind: input, shape index: {}]
  %s10 = inlined_call_operand.vmem [shape: f32[8,1], index: 10, kind: input, shape index: {}]
  %s11 = inlined_call_operand.vmem [shape: f32[2,8,324], index: 11, kind: output, shape index: {}]
  %s12 = sld [smem:[#allocation0]]
  $region77: #{branch_forward.1} parent=0
    _
  %s14 = ssub.s32 1, %s12
  %s15 = scalar_select 0, %s14, %s12
  loop: start=0, step=1, limit=4
  $region2: #{branch_forward.1} parent=0 // loop_pre_header
    _
  $region3: #{branch_forward.1} parent=0 // loop_header
    %s17 = sphi 0, %s21
    %p18 = scmp.ge.s32.totalorder %s17, 4
    %s27 = sphi 0, %s29
    %s30 = sphi 0, %s27
    %s31 = sphi 0, %s30
    %s47 = sphi 0, %s31
    %s51 = sphi 0, %s51
    %s53 = sphi 0, %s51
    %s54 = sphi 0, %s53
    %s68 = sphi 0, %s54
    %s72 = sphi 0, %s72
    %s74 = sphi 0, %s72
    %s75 = sphi 0, %s74
    %s89 = sphi 0, %s75
    %s93 = sphi 0, %s93
    %s95 = sphi 0, %s93
    %s96 = sphi 0, %s95
    %s110 = sphi 0, %s96
    %s114 = sphi 0, %s114
    %s116 = sphi 0, %s114
    %s117 = sphi 0, %s116
    %s131 = sphi 0, %s117
    %s135 = sphi 0, %s135
    %s137 = sphi 0, %s135
    %s138 = sphi 0, %s137
    %s152 = sphi 0, %s138
    %s156 = sphi 0, %s156
    %s158 = sphi 0, %s156
    %s159 = sphi 0, %s158
    %s173 = sphi 0, %s159
    %s177 = sphi 0, %s177
    %s179 = sphi 0, %s177
    %s180 = sphi 0, %s179
    %s194 = sphi 0, %s180
    %s198 = sphi 0, %s198
    %s200 = sphi 0, %s198
    %s201 = sphi 0, %s200
    %s215 = sphi 0, %s201
    %s219 = sphi 0, %s219
    %s221 = sphi 0, %s219
    %s222 = sphi 0, %s221
    %s236 = sphi 0, %s222
    %s240 = sphi 0, %s240
    %s242 = sphi 0, %s240
    %s243 = sphi 0, %s242
    %s257 = sphi 0, %s243
    %s263 = sphi 0, %s265
    %s266 = sphi 0, %s263
    %s267 = sphi 0, %s266
    %s283 = sphi 0, %s267
  $region4: #{branch_forward.1} parent=0 // loop_header_branch
    %20 = sbr.rel (%p18) target = $region8
  $region5: #{branch_forward.1} parent=0 // loop_body
    %s22 = ssub.s32 %s17, 1
    %s23 = ssub.s32 %s17, 2
    %s24 = sadd.s32 %s17, 1
    %s25 = ssub.s32 %s17, %s24
    %p26 = scmp.eq.s32.totalorder %s25, 0
    %s28 = sadd.s32 %s27, 1
    %s29 = scalar_select %p26, %s27, %s28
    %p32 = pneg %p26
    %p33 = scmp.eq.s32.totalorder %s17, 1
    %p34 = por %p32, %p33
    %p35 = scmp.ne.s32.totalorder %s27, %s30
    %p36 = scmp.eq.s32.totalorder %s17, 0
    %p37 = por %p35, %p36
    %p38 = scmp.ne.s32.totalorder %s27, %s30
    %p39 = scmp.eq.s32.totalorder %s22, 1
    %p40 = por %p38, %p39
    %p41 = scmp.ne.s32.totalorder %s30, %s31
    %p42 = scmp.eq.s32.totalorder %s22, 0
    %p43 = por %p41, %p42
    %p44 = scmp.ne.s32.totalorder %s30, %s31
    %p45 = scmp.eq.s32.totalorder %s23, 1
    %p46 = por %p44, %p45
    %p48 = scmp.ne.s32.totalorder %s31, %s47
    %p49 = scmp.eq.s32.totalorder %s23, 0
    %p50 = por %p48, %p49
    %s52 = sadd.s32 %s51, 1
    %p55 = scmp.eq.s32.totalorder %s17, 1
    %p56 = scmp.ne.s32.totalorder %s51, %s53
    %p57 = scmp.eq.s32.totalorder %s17, 0
    %p58 = por %p56, %p57
    %p59 = scmp.ne.s32.totalorder %s51, %s53
    %p60 = scmp.eq.s32.totalorder %s22, 1
    %p61 = por %p59, %p60
    %p62 = scmp.ne.s32.totalorder %s53, %s54
    %p63 = scmp.eq.s32.totalorder %s22, 0
    %p64 = por %p62, %p63
    %p65 = scmp.ne.s32.totalorder %s53, %s54
    %p66 = scmp.eq.s32.totalorder %s23, 1
    %p67 = por %p65, %p66
    %p69 = scmp.ne.s32.totalorder %s54, %s68
    %p70 = scmp.eq.s32.totalorder %s23, 0
    %p71 = por %p69, %p70
    %s73 = sadd.s32 %s72, 1
    %p76 = scmp.eq.s32.totalorder %s17, 1
    %p77 = scmp.ne.s32.totalorder %s72, %s74
    %p78 = scmp.eq.s32.totalorder %s17, 0
    %p79 = por %p77, %p78
    %p80 = scmp.ne.s32.totalorder %s72, %s74
    %p81 = scmp.eq.s32.totalorder %s22, 1
    %p82 = por %p80, %p81
    %p83 = scmp.ne.s32.totalorder %s74, %s75
    %p84 = scmp.eq.s32.totalorder %s22, 0
    %p85 = por %p83, %p84
    %p86 = scmp.ne.s32.totalorder %s74, %s75
    %p87 = scmp.eq.s32.totalorder %s23, 1
    %p88 = por %p86, %p87
    %p90 = scmp.ne.s32.totalorder %s75, %s89
    %p91 = scmp.eq.s32.totalorder %s23, 0
    %p92 = por %p90, %p91
    %s94 = sadd.s32 %s93, 1
    %p97 = scmp.eq.s32.totalorder %s17, 1
    %p98 = scmp.ne.s32.totalorder %s93, %s95
    %p99 = scmp.eq.s32.totalorder %s17, 0
    %p100 = por %p98, %p99
    %p101 = scmp.ne.s32.totalorder %s93, %s95
    %p102 = scmp.eq.s32.totalorder %s22, 1
    %p103 = por %p101, %p102
    %p104 = scmp.ne.s32.totalorder %s95, %s96
    %p105 = scmp.eq.s32.totalorder %s22, 0
    %p106 = por %p104, %p105
    %p107 = scmp.ne.s32.totalorder %s95, %s96
    %p108 = scmp.eq.s32.totalorder %s23, 1
    %p109 = por %p107, %p108
    %p111 = scmp.ne.s32.totalorder %s96, %s110
    %p112 = scmp.eq.s32.totalorder %s23, 0
    %p113 = por %p111, %p112
    %s115 = sadd.s32 %s114, 1
    %p118 = scmp.eq.s32.totalorder %s17, 1
    %p119 = scmp.ne.s32.totalorder %s114, %s116
    %p120 = scmp.eq.s32.totalorder %s17, 0
    %p121 = por %p119, %p120
    %p122 = scmp.ne.s32.totalorder %s114, %s116
    %p123 = scmp.eq.s32.totalorder %s22, 1
    %p124 = por %p122, %p123
    %p125 = scmp.ne.s32.totalorder %s116, %s117
    %p126 = scmp.eq.s32.totalorder %s22, 0
    %p127 = por %p125, %p126
    %p128 = scmp.ne.s32.totalorder %s116, %s117
    %p129 = scmp.eq.s32.totalorder %s23, 1
    %p130 = por %p128, %p129
    %p132 = scmp.ne.s32.totalorder %s117, %s131
    %p133 = scmp.eq.s32.totalorder %s23, 0
    %p134 = por %p132, %p133
    %s136 = sadd.s32 %s135, 1
    %p139 = scmp.eq.s32.totalorder %s17, 1
    %p140 = scmp.ne.s32.totalorder %s135, %s137
    %p141 = scmp.eq.s32.totalorder %s17, 0
    %p142 = por %p140, %p141
    %p143 = scmp.ne.s32.totalorder %s135, %s137
    %p144 = scmp.eq.s32.totalorder %s22, 1
    %p145 = por %p143, %p144
    %p146 = scmp.ne.s32.totalorder %s137, %s138
    %p147 = scmp.eq.s32.totalorder %s22, 0
    %p148 = por %p146, %p147
    %p149 = scmp.ne.s32.totalorder %s137, %s138
    %p150 = scmp.eq.s32.totalorder %s23, 1
    %p151 = por %p149, %p150
    %p153 = scmp.ne.s32.totalorder %s138, %s152
    %p154 = scmp.eq.s32.totalorder %s23, 0
    %p155 = por %p153, %p154
    %s157 = sadd.s32 %s156, 1
    %p160 = scmp.eq.s32.totalorder %s17, 1
    %p161 = scmp.ne.s32.totalorder %s156, %s158
    %p162 = scmp.eq.s32.totalorder %s17, 0
    %p163 = por %p161, %p162
    %p164 = scmp.ne.s32.totalorder %s156, %s158
    %p165 = scmp.eq.s32.totalorder %s22, 1
    %p166 = por %p164, %p165
    %p167 = scmp.ne.s32.totalorder %s158, %s159
    %p168 = scmp.eq.s32.totalorder %s22, 0
    %p169 = por %p167, %p168
    %p170 = scmp.ne.s32.totalorder %s158, %s159
    %p171 = scmp.eq.s32.totalorder %s23, 1
    %p172 = por %p170, %p171
    %p174 = scmp.ne.s32.totalorder %s159, %s173
    %p175 = scmp.eq.s32.totalorder %s23, 0
    %p176 = por %p174, %p175
    %s178 = sadd.s32 %s177, 1
    %p181 = scmp.eq.s32.totalorder %s17, 1
    %p182 = scmp.ne.s32.totalorder %s177, %s179
    %p183 = scmp.eq.s32.totalorder %s17, 0
    %p184 = por %p182, %p183
    %p185 = scmp.ne.s32.totalorder %s177, %s179
    %p186 = scmp.eq.s32.totalorder %s22, 1
    %p187 = por %p185, %p186
    %p188 = scmp.ne.s32.totalorder %s179, %s180
    %p189 = scmp.eq.s32.totalorder %s22, 0
    %p190 = por %p188, %p189
    %p191 = scmp.ne.s32.totalorder %s179, %s180
    %p192 = scmp.eq.s32.totalorder %s23, 1
    %p193 = por %p191, %p192
    %p195 = scmp.ne.s32.totalorder %s180, %s194
    %p196 = scmp.eq.s32.totalorder %s23, 0
    %p197 = por %p195, %p196
    %s199 = sadd.s32 %s198, 1
    %p202 = scmp.eq.s32.totalorder %s17, 1
    %p203 = scmp.ne.s32.totalorder %s198, %s200
    %p204 = scmp.eq.s32.totalorder %s17, 0
    %p205 = por %p203, %p204
    %p206 = scmp.ne.s32.totalorder %s198, %s200
    %p207 = scmp.eq.s32.totalorder %s22, 1
    %p208 = por %p206, %p207
    %p209 = scmp.ne.s32.totalorder %s200, %s201
    %p210 = scmp.eq.s32.totalorder %s22, 0
    %p211 = por %p209, %p210
    %p212 = scmp.ne.s32.totalorder %s200, %s201
    %p213 = scmp.eq.s32.totalorder %s23, 1
    %p214 = por %p212, %p213
    %p216 = scmp.ne.s32.totalorder %s201, %s215
    %p217 = scmp.eq.s32.totalorder %s23, 0
    %p218 = por %p216, %p217
    %s220 = sadd.s32 %s219, 1
    %p223 = scmp.eq.s32.totalorder %s17, 1
    %p224 = scmp.ne.s32.totalorder %s219, %s221
    %p225 = scmp.eq.s32.totalorder %s17, 0
    %p226 = por %p224, %p225
    %p227 = scmp.ne.s32.totalorder %s219, %s221
    %p228 = scmp.eq.s32.totalorder %s22, 1
    %p229 = por %p227, %p228
    %p230 = scmp.ne.s32.totalorder %s221, %s222
    %p231 = scmp.eq.s32.totalorder %s22, 0
    %p232 = por %p230, %p231
    %p233 = scmp.ne.s32.totalorder %s221, %s222
    %p234 = scmp.eq.s32.totalorder %s23, 1
    %p235 = por %p233, %p234
    %p237 = scmp.ne.s32.totalorder %s222, %s236
    %p238 = scmp.eq.s32.totalorder %s23, 0
    %p239 = por %p237, %p238
    %s241 = sadd.s32 %s240, 1
    %p244 = scmp.eq.s32.totalorder %s17, 1
    %p245 = scmp.ne.s32.totalorder %s240, %s242
    %p246 = scmp.eq.s32.totalorder %s17, 0
    %p247 = por %p245, %p246
    %p248 = scmp.ne.s32.totalorder %s240, %s242
    %p249 = scmp.eq.s32.totalorder %s22, 1
    %p250 = por %p248, %p249
    %p251 = scmp.ne.s32.totalorder %s242, %s243
    %p252 = scmp.eq.s32.totalorder %s22, 0
    %p253 = por %p251, %p252
    %p254 = scmp.ne.s32.totalorder %s242, %s243
    %p255 = scmp.eq.s32.totalorder %s23, 1
    %p256 = por %p254, %p255
    %p258 = scmp.ne.s32.totalorder %s243, %s257
    %p259 = scmp.eq.s32.totalorder %s23, 0
    %p260 = por %p258, %p259
    %s261 = ssub.s32 %s17, %s24
    %p262 = scmp.eq.s32.totalorder %s261, 0
    %s264 = sadd.s32 %s263, 1
    %s265 = scalar_select %p262, %s263, %s264
    %p268 = pneg %p262
    %p269 = scmp.eq.s32.totalorder %s17, 1
    %p270 = por %p268, %p269
    %p271 = scmp.ne.s32.totalorder %s263, %s266
    %p272 = scmp.eq.s32.totalorder %s17, 0
    %p273 = por %p271, %p272
    %p274 = scmp.ne.s32.totalorder %s263, %s266
    %p275 = scmp.eq.s32.totalorder %s22, 1
    %p276 = por %p274, %p275
    %p277 = scmp.ne.s32.totalorder %s266, %s267
    %p278 = scmp.eq.s32.totalorder %s22, 0
    %p279 = por %p277, %p278
    %p280 = scmp.ne.s32.totalorder %s266, %s267
    %p281 = scmp.eq.s32.totalorder %s23, 1
    %p282 = por %p280, %p281
    %p284 = scmp.ne.s32.totalorder %s267, %s283
    %p285 = scmp.eq.s32.totalorder %s23, 0
    %p286 = por %p284, %p285
    %p287 = scmp.le.s32.totalorder 1, %s17
    %p288 = scmp.lt.s32.totalorder %s17, 3
    %p289 = pnand %p287, %p288
    %p290 = pneg %p289
    // Predicated region
    $region9: #{branch_forward.1} parent=5 // pred_check
      _
    $region10: #{branch_forward.1} parent=5 // pred_check_branch
      %292 = sbr.rel (%p289) target = $region12
    $region11: #{branch_forward.1} parent=5 // pred_region
      %s293 = ssub.s32 %s17, 1
      // Predicated region
      $region13: #{branch_forward.1} parent=11 // pred_check
        %p294 = pneg %p64
      $region14: #{branch_forward.1} parent=11 // pred_check_branch
        %296 = sbr.rel (%p294) target = $region16
      $region15: #{branch_forward.1} parent=11 // pred_region
        _
      $region16: #{branch_forward.1} parent=11 // pred_fallthru
        _
      // Predicated region
      $region17: #{branch_forward.1} parent=11 // pred_check
        %p297 = pneg %p85
      $region18: #{branch_forward.1} parent=11 // pred_check_branch
        %299 = sbr.rel (%p297) target = $region20
      $region19: #{branch_forward.1} parent=11 // pred_region
        _
      $region20: #{branch_forward.1} parent=11 // pred_fallthru
        _
      // Predicated region
      $region21: #{branch_forward.1} parent=11 // pred_check
        %p300 = pneg %p106
      $region22: #{branch_forward.1} parent=11 // pred_check_branch
        %302 = sbr.rel (%p300) target = $region24
      $region23: #{branch_forward.1} parent=11 // pred_region
        _
      $region24: #{branch_forward.1} parent=11 // pred_fallthru
        _
      // Predicated region
      $region25: #{branch_forward.1} parent=11 // pred_check
        %p303 = pneg %p127
      $region26: #{branch_forward.1} parent=11 // pred_check_branch
        %305 = sbr.rel (%p303) target = $region28
      $region27: #{branch_forward.1} parent=11 // pred_region
        _
      $region28: #{branch_forward.1} parent=11 // pred_fallthru
        _
      // Predicated region
      $region29: #{branch_forward.1} parent=11 // pred_check
        %p306 = pneg %p148
      $region30: #{branch_forward.1} parent=11 // pred_check_branch
        %308 = sbr.rel (%p306) target = $region32
      $region31: #{branch_forward.1} parent=11 // pred_region
        _
      $region32: #{branch_forward.1} parent=11 // pred_fallthru
        _
      // Predicated region
      $region33: #{branch_forward.1} parent=11 // pred_check
        %p309 = pneg %p169
      $region34: #{branch_forward.1} parent=11 // pred_check_branch
        %311 = sbr.rel (%p309) target = $region36
      $region35: #{branch_forward.1} parent=11 // pred_region
        _
      $region36: #{branch_forward.1} parent=11 // pred_fallthru
        _
      // Predicated region
      $region37: #{branch_forward.1} parent=11 // pred_check
        %p312 = pneg %p190
      $region38: #{branch_forward.1} parent=11 // pred_check_branch
        %314 = sbr.rel (%p312) target = $region40
      $region39: #{branch_forward.1} parent=11 // pred_region
        _
      $region40: #{branch_forward.1} parent=11 // pred_fallthru
        _
      // Predicated region
      $region41: #{branch_forward.1} parent=11 // pred_check
        %p315 = pneg %p211
      $region42: #{branch_forward.1} parent=11 // pred_check_branch
        %317 = sbr.rel (%p315) target = $region44
      $region43: #{branch_forward.1} parent=11 // pred_region
        _
      $region44: #{branch_forward.1} parent=11 // pred_fallthru
        _
      // Predicated region
      $region45: #{branch_forward.1} parent=11 // pred_check
        %p318 = pneg %p232
      $region46: #{branch_forward.1} parent=11 // pred_check_branch
        %320 = sbr.rel (%p318) target = $region48
      $region47: #{branch_forward.1} parent=11 // pred_region
        _
      $region48: #{branch_forward.1} parent=11 // pred_fallthru
        _
      // Predicated region
      $region49: #{branch_forward.1} parent=11 // pred_check
        %p321 = pneg %p253
      $region50: #{branch_forward.1} parent=11 // pred_check_branch
        %323 = sbr.rel (%p321) target = $region52
      $region51: #{branch_forward.1} parent=11 // pred_region
        _
      $region52: #{branch_forward.1} parent=11 // pred_fallthru
        _
    $region12: #{branch_forward.1} parent=5 // pred_fallthru
      _
    %p324 = scmp.lt.s32.totalorder %s17, 2
    // Predicated region
    $region53: #{branch_forward.1} parent=5 // pred_check
      %p325 = pneg %p324
    $region54: #{branch_forward.1} parent=5 // pred_check_branch
      %327 = sbr.rel (%p325) target = $region56
    $region55: #{branch_forward.1} parent=5 // pred_region
      // Predicated region
      $region57: #{branch_forward.1} parent=55 // pred_check
        %p328 = pneg %p37
      $region58: #{branch_forward.1} parent=55 // pred_check_branch
        %330 = sbr.rel (%p328) target = $region60
      $region59: #{branch_forward.1} parent=55 // pred_region
        %p331 = scmp.lt.s32.totalorder %s17, 1
        %s332 = scalar_select %p331, %s17, 1
        %s333 = smul.addr %s332, 3
        %s334 = smul.addr %s333, 4
        %s335 = scalar_lea.vmem %s0, %s334
      $region60: #{branch_forward.1} parent=55 // pred_fallthru
        _
    $region56: #{branch_forward.1} parent=5 // pred_fallthru
      _
    %p336 = scmp.le.s32.totalorder 1, %s17
    %p337 = scmp.lt.s32.totalorder %s17, 3
    %p338 = pnand %p336, %p337
    %p339 = pneg %p338
    // Predicated region
    $region61: #{branch_forward.1} parent=5 // pred_check
      _
    $region62: #{branch_forward.1} parent=5 // pred_check_branch
      %341 = sbr.rel (%p338) target = $region64
    $region63: #{branch_forward.1} parent=5 // pred_region
      %s342 = ssub.s32 %s17, 1
      %p343 = scmp.lt.s32.totalorder %s22, 1
      %s344 = scalar_select %p343, %s22, 1
      %s345 = smul.addr %s344, 3
      %s346 = smul.addr %s345, 4
      %s347 = scalar_lea.vmem %s0, %s346
      %p348 = pneg %p43
      %p349 = pneg %p40
      %p350 = pneg %p64
      %p351 = pneg %p61
      %p352 = pneg %p85
      %p353 = pneg %p82
      %p354 = pneg %p106
      %p355 = pneg %p103
      %p356 = pneg %p127
      %p357 = pneg %p124
      %p358 = pneg %p148
      %p359 = pneg %p145
      %p360 = pneg %p169
      %p361 = pneg %p166
      %p362 = pneg %p190
      %p363 = pneg %p187
      %p364 = pneg %p211
      %p365 = pneg %p208
      %p366 = pneg %p232
      %p367 = pneg %p229
      %p368 = pneg %p253
      %p369 = pneg %p250
      %p370 = pneg %p279
      %p371 = pneg %p276
      %p372 = scmp.lt.s32.totalorder %s22, 1
      %s373 = scalar_select %p372, %s22, 1
      %s374 = smul.addr %s373, 3
      %s375 = smul.addr %s374, 8
      %s376 = scalar_lea.vmem %s11, %s375
      %p377 = scmp.lt.s32.totalorder %s22, 1
      %s378 = scalar_select %p377, %s22, 1
      %s379 = smul.addr %s378, 3
      %s380 = smul.addr %s379, 4
      %s381 = scalar_lea.vmem %s0, %s380
      %p382 = scmp.lt.s32.totalorder %s22, 1
      %s383 = scalar_select %p382, %s22, 1
      %s384 = smul.addr %s383, 3
      %s385 = smul.addr %s384, 8
      %s386 = scalar_lea.vmem %s11, %s385
      %v388 = vld [vmem:[%s1] sm:$0x7]
      %389 = vst [vmem:[#allocation2] sm:$0xff] 0.0
      %vm390 = vcmask 863232
      %391 = vst.msk [vmem:[#allocation2 + $0x8] sm:$0xf] %vm390, 0.0
      %v392 = vld [vmem:[%s381] sm:$0xff]
      %v393 = vld [vmem:[%s381 + $0x8] sm:$0xf]
      %396 = vrot.lane.b32.xlu0 %v392, 19
      %v397 = vpop.permute.xlu0 %396
      %398 = vrot.lane.b32.xlu0 %v393, 19
      %v399 = vpop.permute.xlu0 %398
      %v400 = vrot.slane %v397, 4
      %vm401 = vcmask 154624
      %v402 = vsel %vm401, %v400, %v397
      %v403 = vsel %vm401, %v400, %v399
      %vm406 = vcmask 1043608
      %vm407 = vcmask 1047556
      %vm408 = vmor %vm407, %vm406
      %409 = vst.msk [vmem:[#allocation2] sm:$0xff] %vm408, %v402
      %vm410 = vcmask 707584
      %411 = vst.msk [vmem:[#allocation2 + $0x8] sm:$0xf] %vm410, %v403
      %v412 = vld [vmem:[#allocation2] sm:$0xff]
      %v413 = vld [vmem:[#allocation2 + $0x8] sm:$0xf]
      %v415 = vcombine.high %v412, %v412
      %417 = vst [vmem:[#allocation3] sm:$0xf] %v412
      %418 = vst [vmem:[#allocation3 + $0x8] sm:$0xf] %v415
      %vm419 = vcmask 551936
      %420 = vst.msk [vmem:[#allocation3 + $0x10] sm:$0xf] %vm419, %v413
      %v421 = vld [vmem:[#allocation2] sm:$0xff]
      %v422 = vld [vmem:[#allocation2 + $0x8] sm:$0xf]
      %v425 = vcombine.low %v421, %v421
      %v426 = vcombine.low %v422, %v422
      %427 = vrot.lane.b32.xlu0 %v425, 127
      %v428 = vpop.permute.xlu0 %427
      %429 = vrot.lane.b32.xlu0 %v421, 127
      %v430 = vpop.permute.xlu0 %429
      %431 = vrot.lane.b32.xlu0 %v426, 127
      %v432 = vpop.permute.xlu0 %431
      %vm433 = vcmask 1039360
      %v434 = vsel %vm433, %v428, %v430
      %v435 = vsel %vm433, %v430, %v432
      %439 = vst [vmem:[#allocation3] sm:$0xf0] %v434
      %440 = vst [vmem:[#allocation3 + $0x8] sm:$0xf0] %v435
      %vm441 = vcmask 556036
      %442 = vst.msk [vmem:[#allocation3 + $0x10] sm:$0xf0] %vm441, %v432
      %v443 = vld [vmem:[#allocation2] sm:$0xff]
      %v444 = vld [vmem:[#allocation2 + $0x8] sm:$0xf]
      %v447 = vcombine.high %v443, %v443
      %448 = vrot.lane.b32.xlu0 %v443, 126
      %v449 = vpop.permute.xlu0 %448
      %450 = vrot.lane.b32.xlu0 %v447, 126
      %v451 = vpop.permute.xlu0 %450
      %452 = vrot.lane.b32.xlu0 %v444, 126
      %v453 = vpop.permute.xlu0 %452
      %vm454 = vcmask 1031168
      %v455 = vsel %vm454, %v449, %v451
      %v456 = vsel %vm454, %v451, %v453
      %460 = vst [vmem:[#allocation3 + $0x18] sm:$0xf] %v455
      %461 = vst [vmem:[#allocation3 + $0x20] sm:$0xf] %v456
      %462 = vst.msk [vmem:[#allocation3 + $0x28] sm:$0xf] %vm419, %v453
      %v463 = vld [vmem:[#allocation2] sm:$0xff]
      %v464 = vld [vmem:[#allocation2 + $0x8] sm:$0xf]
      %v467 = vcombine.low %v463, %v463
      %v468 = vcombine.low %v464, %v464
      %469 = vrot.lane.b32.xlu0 %v467, 110
      %v470 = vpop.permute.xlu0 %469
      %471 = vrot.lane.b32.xlu0 %v463, 110
      %v472 = vpop.permute.xlu0 %471
      %473 = vrot.lane.b32.xlu0 %v468, 110
      %v474 = vpop.permute.xlu0 %473
      %vm475 = vcmask 900096
      %v476 = vsel %vm475, %v470, %v472
      %v477 = vsel %vm475, %v472, %v474
      %481 = vst [vmem:[#allocation3 + $0x18] sm:$0xf0] %v476
      %482 = vst [vmem:[#allocation3 + $0x20] sm:$0xf0] %v477
      %483 = vst.msk [vmem:[#allocation3 + $0x28] sm:$0xf0] %vm441, %v474
      %v484 = vld [vmem:[#allocation2] sm:$0xff]
      %v485 = vld [vmem:[#allocation2 + $0x8] sm:$0xf]
      %v488 = vcombine.high %v484, %v484
      %489 = vrot.lane.b32.xlu0 %v484, 109
      %v490 = vpop.permute.xlu0 %489
      %491 = vrot.lane.b32.xlu0 %v488, 109
      %v492 = vpop.permute.xlu0 %491
      %493 = vrot.lane.b32.xlu0 %v485, 109
      %v494 = vpop.permute.xlu0 %493
      %vm495 = vcmask 891904
      %v496 = vsel %vm495, %v490, %v492
      %v497 = vsel %vm495, %v492, %v494
      %501 = vst [vmem:[#allocation3 + $0x30] sm:$0xf] %v496
      %502 = vst [vmem:[#allocation3 + $0x38] sm:$0xf] %v497
      %503 = vst.msk [vmem:[#allocation3 + $0x40] sm:$0xf] %vm419, %v494
      %v504 = vld [vmem:[#allocation2] sm:$0xff]
      %v505 = vld [vmem:[#allocation2 + $0x8] sm:$0xf]
      %v508 = vcombine.low %v504, %v504
      %v509 = vcombine.low %v505, %v505
      %510 = vrot.lane.b32.xlu0 %v508, 108
      %v511 = vpop.permute.xlu0 %510
      %512 = vrot.lane.b32.xlu0 %v504, 108
      %v513 = vpop.permute.xlu0 %512
      %514 = vrot.lane.b32.xlu0 %v509, 108
      %v515 = vpop.permute.xlu0 %514
      %vm516 = vcmask 883712
      %v517 = vsel %vm516, %v511, %v513
      %v518 = vsel %vm516, %v513, %v515
      %522 = vst [vmem:[#allocation3 + $0x30] sm:$0xf0] %v517
      %523 = vst [vmem:[#allocation3 + $0x38] sm:$0xf0] %v518
      %524 = vst.msk [vmem:[#allocation3 + $0x40] sm:$0xf0] %vm441, %v515
      %v525 = vld [vmem:[#allocation2] sm:$0xff]
      %v526 = vld [vmem:[#allocation2 + $0x8] sm:$0xf]
      %v529 = vcombine.high %v525, %v525
      %530 = vrot.lane.b32.xlu0 %v525, 92
      %v531 = vpop.permute.xlu0 %530
      %532 = vrot.lane.b32.xlu0 %v529, 92
      %v533 = vpop.permute.xlu0 %532
      %534 = vrot.lane.b32.xlu0 %v526, 92
      %v535 = vpop.permute.xlu0 %534
      %vm536 = vcmask 752640
      %v537 = vsel %vm536, %v531, %v533
      %v538 = vsel %vm536, %v533, %v535
      %542 = vst [vmem:[#allocation3 + $0x48] sm:$0xf] %v537
      %543 = vst [vmem:[#allocation3 + $0x50] sm:$0xf] %v538
      %544 = vst.msk [vmem:[#allocation3 + $0x58] sm:$0xf] %vm419, %v535
      %v545 = vld [vmem:[#allocation2] sm:$0xff]
      %v546 = vld [vmem:[#allocation2 + $0x8] sm:$0xf]
      %v549 = vcombine.low %v545, %v545
      %v550 = vcombine.low %v546, %v546
      %551 = vrot.lane.b32.xlu0 %v549, 91
      %v552 = vpop.permute.xlu0 %551
      %553 = vrot.lane.b32.xlu0 %v545, 91
      %v554 = vpop.permute.xlu0 %553
      %555 = vrot.lane.b32.xlu0 %v550, 91
      %v556 = vpop.permute.xlu0 %555
      %vm557 = vcmask 744448
      %v558 = vsel %vm557, %v552, %v554
      %v559 = vsel %vm557, %v554, %v556
      %563 = vst [vmem:[#allocation3 + $0x48] sm:$0xf0] %v558
      %564 = vst [vmem:[#allocation3 + $0x50] sm:$0xf0] %v559
      %565 = vst.msk [vmem:[#allocation3 + $0x58] sm:$0xf0] %vm441, %v556
      %v566 = vld [vmem:[#allocation2] sm:$0xff]
      %v567 = vld [vmem:[#allocation2 + $0x8] sm:$0xf]
      %v570 = vcombine.high %v566, %v566
      %571 = vrot.lane.b32.xlu0 %v566, 90
      %v572 = vpop.permute.xlu0 %571
      %573 = vrot.lane.b32.xlu0 %v570, 90
      %v574 = vpop.permute.xlu0 %573
      %575 = vrot.lane.b32.xlu0 %v567, 90
      %v576 = vpop.permute.xlu0 %575
      %vm577 = vcmask 736256
      %v578 = vsel %vm577, %v572, %v574
      %v579 = vsel %vm577, %v574, %v576
      %583 = vst [vmem:[#allocation3 + $0x60] sm:$0xf] %v578
      %584 = vst [vmem:[#allocation3 + $0x68] sm:$0xf] %v579
      %585 = vst.msk [vmem:[#allocation3 + $0x70] sm:$0xf] %vm419, %v576
      %v586 = vld [vmem:[#allocation3] sm:$0xff]
      %v587 = vld [vmem:[#allocation3 + $0x8] sm:$0xff]
      %v588 = vld [vmem:[#allocation3 + $0x10] sm:$0xff]
      %v589 = vld [vmem:[#allocation3 + $0x18] sm:$0xff]
      %v590 = vld [vmem:[#allocation3 + $0x20] sm:$0xff]
      %v591 = vld [vmem:[#allocation3 + $0x28] sm:$0xff]
      %v592 = vld [vmem:[#allocation3 + $0x30] sm:$0xff]
      %v593 = vld [vmem:[#allocation3 + $0x38] sm:$0xff]
      %v594 = vld [vmem:[#allocation3 + $0x40] sm:$0xff]
      %v595 = vld [vmem:[#allocation3 + $0x48] sm:$0xff]
      %v596 = vld [vmem:[#allocation3 + $0x50] sm:$0xff]
      %v597 = vld [vmem:[#allocation3 + $0x58] sm:$0xff]
      %v598 = vld [vmem:[#allocation3 + $0x60] sm:$0xf]
      %v599 = vld [vmem:[#allocation3 + $0x68] sm:$0xf]
      %v600 = vld [vmem:[#allocation3 + $0x70] sm:$0xf]
      %v601 = vpack.c.bf16 %v589, %v586
      %v602 = vpack.c.bf16 %v590, %v587
      %v603 = vpack.c.bf16 %v591, %v588
      %v604 = vpack.c.bf16 %v595, %v592
      %v605 = vpack.c.bf16 %v596, %v593
      %v606 = vpack.c.bf16 %v597, %v594
      %v607 = vpack.c.bf16 %v598, %v598
      %v608 = vpack.c.bf16 %v599, %v599
      %v609 = vpack.c.bf16 %v600, %v600
      %v610 = vld [vmem:[%s2] sm:$0xf]
      %v611 = vpack.c.bf16 %v610, %v610
      %vm612 = vcmask 293888
      %v614 = vsel %vm612, %v611, 0
      %vm616 = vcmask 1041408
      %v618 = vsel %vm616, %v607, 0
      %v621 = vsel %vm616, %v608, 0
      %v624 = vsel %vm616, %v609, 0
      %626 = vmatprep.subr.bf16.mxu0 %v602
      %627 = vmatpush1.bf16.msra.mxu0 %v601
      %628 = vmatprep.subr.bf16.mxu0 %v605
      %629 = vmatpush1.bf16.msra.mxu0 %v604
      %630 = vmatprep.subr.bf16.mxu0 %v621
      %631 = vmatpush1.bf16.msra.mxu0 %v618
      %632 = vmatprep.subr.bf16.mxu0 0
      %633 = vmatpush1.bf16.msra.mxu0 0
      %634 = vmatprep.subr.bf16.mxu0 0
      %635 = vmatpush1.bf16.msra.mxu0 0
      %636 = vmatprep.subr.bf16.mxu0 0
      %637 = vmatpush1.bf16.msra.mxu0 0
      %638 = vmatprep.subr.bf16.mxu0 0
      %639 = vmatpush1.bf16.msra.mxu0 0
      %640 = vmatprep.subr.bf16.mxu0 0
      %641 = vmatpush1.bf16.msra.mxu0 0
      %642 = vmatprep.subr.bf16.mxu0 0
      %643 = vmatpush1.bf16.msra.mxu0 0
      %644 = vmatprep.subr.bf16.mxu0 0
      %645 = vmatpush1.bf16.msra.mxu0 0
      %646 = vmatprep.subr.bf16.mxu0 0
      %647 = vmatpush1.bf16.msra.mxu0 0
      %648 = vmatprep.subr.bf16.mxu0 0
      %649 = vmatpush1.bf16.msra.mxu0 0
      %650 = vmatprep.subr.bf16.mxu0 0
      %651 = vmatpush1.bf16.msra.mxu0 0
      %652 = vmatprep.subr.bf16.mxu0 0
      %653 = vmatpush1.bf16.msra.mxu0 0
      %654 = vmatprep.subr.bf16.mxu0 0
      %655 = vmatpush1.bf16.msra.mxu0 0
      %656 = vmatprep.subr.bf16.mxu0 0
      %657 = vmatpush1.bf16.msra.mxu0 0
      %658 = vmatprep.mubr.bf16.mxu0 0
      %659 = vmatmul.mubr.bf16.gmra.mrb[0].mxu0 %v614
      %v660 = vpop.f32.mrb[0].mxu0
      %v661 = vadd.f32 0.0, %v660
      %v662 = vpop.f32.mrb[0].mxu0
      %v663 = vadd.f32 0.0, %v662
      %v664 = vpop.f32.mrb[0].mxu0
      %v665 = vpop.f32.mrb[0].mxu0
      %666 = vdwg.mxu0
      %667 = vmatprep.subr.bf16.mxu0 0
      %668 = vmatpush1.bf16.msra.mxu0 %v603
      %669 = vmatprep.subr.bf16.mxu0 0
      %670 = vmatpush1.bf16.msra.mxu0 %v606
      %671 = vmatprep.subr.bf16.mxu0 0
      %672 = vmatpush1.bf16.msra.mxu0 %v624
      %673 = vmatprep.subr.bf16.mxu0 0
      %674 = vmatpush1.bf16.msra.mxu0 0
      %675 = vmatprep.subr.bf16.mxu0 0
      %676 = vmatpush1.bf16.msra.mxu0 0
      %677 = vmatprep.subr.bf16.mxu0 0
      %678 = vmatpush1.bf16.msra.mxu0 0
      %679 = vmatprep.subr.bf16.mxu0 0
      %680 = vmatpush1.bf16.msra.mxu0 0
      %681 = vmatprep.subr.bf16.mxu0 0
      %682 = vmatpush1.bf16.msra.mxu0 0
      %683 = vmatprep.subr.bf16.mxu0 0
      %684 = vmatpush1.bf16.msra.mxu0 0
      %685 = vmatprep.subr.bf16.mxu0 0
      %686 = vmatpush1.bf16.msra.mxu0 0
      %687 = vmatprep.subr.bf16.mxu0 0
      %688 = vmatpush1.bf16.msra.mxu0 0
      %689 = vmatprep.subr.bf16.mxu0 0
      %690 = vmatpush1.bf16.msra.mxu0 0
      %691 = vmatprep.subr.bf16.mxu0 0
      %692 = vmatpush1.bf16.msra.mxu0 0
      %693 = vmatprep.subr.bf16.mxu0 0
      %694 = vmatpush1.bf16.msra.mxu0 0
      %695 = vmatprep.subr.bf16.mxu0 0
      %696 = vmatpush1.bf16.msra.mxu0 0
      %697 = vmatprep.subr.bf16.mxu0 0
      %698 = vmatpush1.bf16.msra.mxu0 0
      %699 = vmatprep.mubr.bf16.mxu0 0
      %700 = vmatmul.mubr.bf16.gmra.mrb[0].mxu0 %v614
      %v701 = vpop.f32.mrb[0].mxu0
      %v702 = vadd.f32 0.0, %v701
      %v703 = vpop.f32.mrb[0].mxu0
      %v704 = vpop.f32.mrb[0].mxu0
      %v705 = vpop.f32.mrb[0].mxu0
      %706 = vdwg.mxu0
      %v707 = vld [vmem:[%s3] sm:$0xf]
      %709 = vset.pattern.permute.xlu0 0
      %710 = vperm.xlu0 %709, %v707
      %v711 = vpop.permute.xlu0 %710
      %v713 = vmul.f32 %v661, %v711
      %v714 = vmul.f32 %v663, %v711
      %v715 = vmul.f32 %v702, %v711
      %v716 = vld [vmem:[%s4] sm:$0xf]
      %718 = vset.pattern.permute.xlu0 0
      %719 = vperm.xlu0 %718, %v716
      %v720 = vpop.permute.xlu0 %719
      %v722 = vadd.f32 %v713, %v720
      %v723 = vadd.f32 %v714, %v720
      %v724 = vadd.f32 %v715, %v720
      %vm725 = vcmp.ge.f32.partialorder %v722, 0.0
      %vm726 = vcmp.ge.f32.partialorder %v723, 0.0
      %vm727 = vcmp.ge.f32.partialorder %v724, 0.0
      %v728 = vmul.f32 %v722, 0.01
      %v729 = vmul.f32 %v723, 0.01
      %v730 = vmul.f32 %v724, 0.01
      %v731 = vsel %vm725, %v722, %v728
      %v732 = vsel %vm726, %v723, %v729
      %v733 = vsel %vm727, %v724, %v730
      %v735 = vlaneseq
      %v736 = vshrl.u32 %v735, 7
      %v737 = vsub.s32 0, %v736
      %v738 = vrot.slane %v388, %v737
      %v739 = vlaneseq
      %v740 = vshrl.u32 %v739, 7
      %v741 = vsub.s32 1, %v740
      %v742 = vrot.slane %v388, %v741
      %v743 = vlaneseq
      %v744 = vshrl.u32 %v743, 7
      %v745 = vsub.s32 2, %v744
      %v746 = vrot.slane %v388, %v745
      %v750 = vmul.f32 %v731, %v738
      %v751 = vmul.f32 %v732, %v742
      %v752 = vmul.f32 %v733, %v746
      %v756 = vcombine.low %v750, %v751
      %757 = vrot.lane.b32.xlu0 %v756, 19
      %v758 = vpop.permute.xlu0 %757
      %759 = vrot.lane.b32.xlu0 %v752, 19
      %v760 = vpop.permute.xlu0 %759
      %v761 = vrot.slane %v758, 4
      %v762 = vsel %vm401, %v761, %v758
      %v763 = vsel %vm401, %v761, %v760
      %766 = vst.msk [vmem:[#allocation2] sm:$0xff] %vm408, %v762
      %767 = vst.msk [vmem:[#allocation2 + $0x8] sm:$0xf] %vm410, %v763
      %v768 = vld [vmem:[#allocation2] sm:$0xff]
      %v769 = vld [vmem:[#allocation2 + $0x8] sm:$0xf]
      %v771 = vcombine.high %v768, %v768
      %773 = vst [vmem:[#allocation3] sm:$0xf] %v768
      %774 = vst [vmem:[#allocation3 + $0x8] sm:$0xf] %v771
      %775 = vst.msk [vmem:[#allocation3 + $0x10] sm:$0xf] %vm419, %v769
      %v776 = vld [vmem:[#allocation2] sm:$0xff]
      %v777 = vld [vmem:[#allocation2 + $0x8] sm:$0xf]
      %v780 = vcombine.low %v776, %v776
      %v781 = vcombine.low %v777, %v777
      %782 = vrot.lane.b32.xlu0 %v780, 127
      %v783 = vpop.permute.xlu0 %782
      %784 = vrot.lane.b32.xlu0 %v776, 127
      %v785 = vpop.permute.xlu0 %784
      %786 = vrot.lane.b32.xlu0 %v781, 127
      %v787 = vpop.permute.xlu0 %786
      %v788 = vsel %vm433, %v783, %v785
      %v789 = vsel %vm433, %v785, %v787
      %793 = vst [vmem:[#allocation3] sm:$0xf0] %v788
      %794 = vst [vmem:[#allocation3 + $0x8] sm:$0xf0] %v789
      %795 = vst.msk [vmem:[#allocation3 + $0x10] sm:$0xf0] %vm441, %v787
      %v796 = vld [vmem:[#allocation2] sm:$0xff]
      %v797 = vld [vmem:[#allocation2 + $0x8] sm:$0xf]
      %v800 = vcombine.high %v796, %v796
      %801 = vrot.lane.b32.xlu0 %v796, 126
      %v802 = vpop.permute.xlu0 %801
      %803 = vrot.lane.b32.xlu0 %v800, 126
      %v804 = vpop.permute.xlu0 %803
      %805 = vrot.lane.b32.xlu0 %v797, 126
      %v806 = vpop.permute.xlu0 %805
      %v807 = vsel %vm454, %v802, %v804
      %v808 = vsel %vm454, %v804, %v806
      %812 = vst [vmem:[#allocation3 + $0x18] sm:$0xf] %v807
      %813 = vst [vmem:[#allocation3 + $0x20] sm:$0xf] %v808
      %814 = vst.msk [vmem:[#allocation3 + $0x28] sm:$0xf] %vm419, %v806
      %v815 = vld [vmem:[#allocation2] sm:$0xff]
      %v816 = vld [vmem:[#allocation2 + $0x8] sm:$0xf]
      %v819 = vcombine.low %v815, %v815
      %v820 = vcombine.low %v816, %v816
      %821 = vrot.lane.b32.xlu0 %v819, 110
      %v822 = vpop.permute.xlu0 %821
      %823 = vrot.lane.b32.xlu0 %v815, 110
      %v824 = vpop.permute.xlu0 %823
      %825 = vrot.lane.b32.xlu0 %v820, 110
      %v826 = vpop.permute.xlu0 %825
      %v827 = vsel %vm475, %v822, %v824
      %v828 = vsel %vm475, %v824, %v826
      %832 = vst [vmem:[#allocation3 + $0x18] sm:$0xf0] %v827
      %833 = vst [vmem:[#allocation3 + $0x20] sm:$0xf0] %v828
      %834 = vst.msk [vmem:[#allocation3 + $0x28] sm:$0xf0] %vm441, %v826
      %v835 = vld [vmem:[#allocation2] sm:$0xff]
      %v836 = vld [vmem:[#allocation2 + $0x8] sm:$0xf]
      %v839 = vcombine.high %v835, %v835
      %840 = vrot.lane.b32.xlu0 %v835, 109
      %v841 = vpop.permute.xlu0 %840
      %842 = vrot.lane.b32.xlu0 %v839, 109
      %v843 = vpop.permute.xlu0 %842
      %844 = vrot.lane.b32.xlu0 %v836, 109
      %v845 = vpop.permute.xlu0 %844
      %v846 = vsel %vm495, %v841, %v843
      %v847 = vsel %vm495, %v843, %v845
      %851 = vst [vmem:[#allocation3 + $0x30] sm:$0xf] %v846
      %852 = vst [vmem:[#allocation3 + $0x38] sm:$0xf] %v847
      %853 = vst.msk [vmem:[#allocation3 + $0x40] sm:$0xf] %vm419, %v845
      %v854 = vld [vmem:[#allocation2] sm:$0xff]
      %v855 = vld [vmem:[#allocation2 + $0x8] sm:$0xf]
      %v858 = vcombine.low %v854, %v854
      %v859 = vcombine.low %v855, %v855
      %860 = vrot.lane.b32.xlu0 %v858, 108
      %v861 = vpop.permute.xlu0 %860
      %862 = vrot.lane.b32.xlu0 %v854, 108
      %v863 = vpop.permute.xlu0 %862
      %864 = vrot.lane.b32.xlu0 %v859, 108
      %v865 = vpop.permute.xlu0 %864
      %v866 = vsel %vm516, %v861, %v863
      %v867 = vsel %vm516, %v863, %v865
      %871 = vst [vmem:[#allocation3 + $0x30] sm:$0xf0] %v866
      %872 = vst [vmem:[#allocation3 + $0x38] sm:$0xf0] %v867
      %873 = vst.msk [vmem:[#allocation3 + $0x40] sm:$0xf0] %vm441, %v865
      %v874 = vld [vmem:[#allocation2] sm:$0xff]
      %v875 = vld [vmem:[#allocation2 + $0x8] sm:$0xf]
      %v878 = vcombine.high %v874, %v874
      %879 = vrot.lane.b32.xlu0 %v874, 92
      %v880 = vpop.permute.xlu0 %879
      %881 = vrot.lane.b32.xlu0 %v878, 92
      %v882 = vpop.permute.xlu0 %881
      %883 = vrot.lane.b32.xlu0 %v875, 92
      %v884 = vpop.permute.xlu0 %883
      %v885 = vsel %vm536, %v880, %v882
      %v886 = vsel %vm536, %v882, %v884
      %890 = vst [vmem:[#allocation3 + $0x48] sm:$0xf] %v885
      %891 = vst [vmem:[#allocation3 + $0x50] sm:$0xf] %v886
      %892 = vst.msk [vmem:[#allocation3 + $0x58] sm:$0xf] %vm419, %v884
      %v893 = vld [vmem:[#allocation2] sm:$0xff]
      %v894 = vld [vmem:[#allocation2 + $0x8] sm:$0xf]
      %v897 = vcombine.low %v893, %v893
      %v898 = vcombine.low %v894, %v894
      %899 = vrot.lane.b32.xlu0 %v897, 91
      %v900 = vpop.permute.xlu0 %899
      %901 = vrot.lane.b32.xlu0 %v893, 91
      %v902 = vpop.permute.xlu0 %901
      %903 = vrot.lane.b32.xlu0 %v898, 91
      %v904 = vpop.permute.xlu0 %903
      %v905 = vsel %vm557, %v900, %v902
      %v906 = vsel %vm557, %v902, %v904
      %910 = vst [vmem:[#allocation3 + $0x48] sm:$0xf0] %v905
      %911 = vst [vmem:[#allocation3 + $0x50] sm:$0xf0] %v906
      %912 = vst.msk [vmem:[#allocation3 + $0x58] sm:$0xf0] %vm441, %v904
      %v913 = vld [vmem:[#allocation2] sm:$0xff]
      %v914 = vld [vmem:[#allocation2 + $0x8] sm:$0xf]
      %v917 = vcombine.high %v913, %v913
      %918 = vrot.lane.b32.xlu0 %v913, 90
      %v919 = vpop.permute.xlu0 %918
      %920 = vrot.lane.b32.xlu0 %v917, 90
      %v921 = vpop.permute.xlu0 %920
      %922 = vrot.lane.b32.xlu0 %v914, 90
      %v923 = vpop.permute.xlu0 %922
      %v924 = vsel %vm577, %v919, %v921
      %v925 = vsel %vm577, %v921, %v923
      %929 = vst [vmem:[#allocation3 + $0x60] sm:$0xf] %v924
      %930 = vst [vmem:[#allocation3 + $0x68] sm:$0xf] %v925
      %931 = vst.msk [vmem:[#allocation3 + $0x70] sm:$0xf] %vm419, %v923
      %v932 = vld [vmem:[#allocation3] sm:$0xff]
      %v933 = vld [vmem:[#allocation3 + $0x8] sm:$0xff]
      %v934 = vld [vmem:[#allocation3 + $0x10] sm:$0xff]
      %v935 = vld [vmem:[#allocation3 + $0x18] sm:$0xff]
      %v936 = vld [vmem:[#allocation3 + $0x20] sm:$0xff]
      %v937 = vld [vmem:[#allocation3 + $0x28] sm:$0xff]
      %v938 = vld [vmem:[#allocation3 + $0x30] sm:$0xff]
      %v939 = vld [vmem:[#allocation3 + $0x38] sm:$0xff]
      %v940 = vld [vmem:[#allocation3 + $0x40] sm:$0xff]
      %v941 = vld [vmem:[#allocation3 + $0x48] sm:$0xff]
      %v942 = vld [vmem:[#allocation3 + $0x50] sm:$0xff]
      %v943 = vld [vmem:[#allocation3 + $0x58] sm:$0xff]
      %v944 = vld [vmem:[#allocation3 + $0x60] sm:$0xf]
      %v945 = vld [vmem:[#allocation3 + $0x68] sm:$0xf]
      %v946 = vld [vmem:[#allocation3 + $0x70] sm:$0xf]
      %v947 = vpack.c.bf16 %v935, %v932
      %v948 = vpack.c.bf16 %v936, %v933
      %v949 = vpack.c.bf16 %v937, %v934
      %v950 = vpack.c.bf16 %v941, %v938
      %v951 = vpack.c.bf16 %v942, %v939
      %v952 = vpack.c.bf16 %v943, %v940
      %v953 = vpack.c.bf16 %v944, %v944
      %v954 = vpack.c.bf16 %v945, %v945
      %v955 = vpack.c.bf16 %v946, %v946
      %v956 = vld [vmem:[%s5] sm:$0xf]
      %v957 = vpack.c.bf16 %v956, %v956
      %v959 = vsel %vm612, %v957, 0
      %v962 = vsel %vm616, %v953, 0
      %v965 = vsel %vm616, %v954, 0
      %v968 = vsel %vm616, %v955, 0
      %970 = vmatprep.subr.bf16.mxu0 %v948
      %971 = vmatpush1.bf16.msra.mxu0 %v947
      %972 = vmatprep.subr.bf16.mxu0 %v951
      %973 = vmatpush1.bf16.msra.mxu0 %v950
      %974 = vmatprep.subr.bf16.mxu0 %v965
      %975 = vmatpush1.bf16.msra.mxu0 %v962
      %976 = vmatprep.subr.bf16.mxu0 0
      %977 = vmatpush1.bf16.msra.mxu0 0
      %978 = vmatprep.subr.bf16.mxu0 0
      %979 = vmatpush1.bf16.msra.mxu0 0
      %980 = vmatprep.subr.bf16.mxu0 0
      %981 = vmatpush1.bf16.msra.mxu0 0
      %982 = vmatprep.subr.bf16.mxu0 0
      %983 = vmatpush1.bf16.msra.mxu0 0
      %984 = vmatprep.subr.bf16.mxu0 0
      %985 = vmatpush1.bf16.msra.mxu0 0
      %986 = vmatprep.subr.bf16.mxu0 0
      %987 = vmatpush1.bf16.msra.mxu0 0
      %988 = vmatprep.subr.bf16.mxu0 0
      %989 = vmatpush1.bf16.msra.mxu0 0
      %990 = vmatprep.subr.bf16.mxu0 0
      %991 = vmatpush1.bf16.msra.mxu0 0
      %992 = vmatprep.subr.bf16.mxu0 0
      %993 = vmatpush1.bf16.msra.mxu0 0
      %994 = vmatprep.subr.bf16.mxu0 0
      %995 = vmatpush1.bf16.msra.mxu0 0
      %996 = vmatprep.subr.bf16.mxu0 0
      %997 = vmatpush1.bf16.msra.mxu0 0
      %998 = vmatprep.subr.bf16.mxu0 0
      %999 = vmatpush1.bf16.msra.mxu0 0
      %1000 = vmatprep.subr.bf16.mxu0 0
      %1001 = vmatpush1.bf16.msra.mxu0 0
      %1002 = vmatprep.mubr.bf16.mxu0 0
      %1003 = vmatmul.mubr.bf16.gmra.mrb[0].mxu0 %v959
      %v1004 = vpop.f32.mrb[0].mxu0
      %v1005 = vadd.f32 0.0, %v1004
      %v1006 = vpop.f32.mrb[0].mxu0
      %v1007 = vadd.f32 0.0, %v1006
      %v1008 = vpop.f32.mrb[0].mxu0
      %v1009 = vpop.f32.mrb[0].mxu0
      %1010 = vdwg.mxu0
      %1011 = vmatprep.subr.bf16.mxu0 0
      %1012 = vmatpush1.bf16.msra.mxu0 %v949
      %1013 = vmatprep.subr.bf16.mxu0 0
      %1014 = vmatpush1.bf16.msra.mxu0 %v952
      %1015 = vmatprep.subr.bf16.mxu0 0
      %1016 = vmatpush1.bf16.msra.mxu0 %v968
      %1017 = vmatprep.subr.bf16.mxu0 0
      %1018 = vmatpush1.bf16.msra.mxu0 0
      %1019 = vmatprep.subr.bf16.mxu0 0
      %1020 = vmatpush1.bf16.msra.mxu0 0
      %1021 = vmatprep.subr.bf16.mxu0 0
      %1022 = vmatpush1.bf16.msra.mxu0 0
      %1023 = vmatprep.subr.bf16.mxu0 0
      %1024 = vmatpush1.bf16.msra.mxu0 0
      %1025 = vmatprep.subr.bf16.mxu0 0
      %1026 = vmatpush1.bf16.msra.mxu0 0
      %1027 = vmatprep.subr.bf16.mxu0 0
      %1028 = vmatpush1.bf16.msra.mxu0 0
      %1029 = vmatprep.subr.bf16.mxu0 0
      %1030 = vmatpush1.bf16.msra.mxu0 0
      %1031 = vmatprep.subr.bf16.mxu0 0
      %1032 = vmatpush1.bf16.msra.mxu0 0
      %1033 = vmatprep.subr.bf16.mxu0 0
      %1034 = vmatpush1.bf16.msra.mxu0 0
      %1035 = vmatprep.subr.bf16.mxu0 0
      %1036 = vmatpush1.bf16.msra.mxu0 0
      %1037 = vmatprep.subr.bf16.mxu0 0
      %1038 = vmatpush1.bf16.msra.mxu0 0
      %1039 = vmatprep.subr.bf16.mxu0 0
      %1040 = vmatpush1.bf16.msra.mxu0 0
      %1041 = vmatprep.subr.bf16.mxu0 0
      %1042 = vmatpush1.bf16.msra.mxu0 0
      %1043 = vmatprep.mubr.bf16.mxu0 0
      %1044 = vmatmul.mubr.bf16.gmra.mrb[0].mxu0 %v959
      %v1045 = vpop.f32.mrb[0].mxu0
      %v1046 = vadd.f32 0.0, %v1045
      %v1047 = vpop.f32.mrb[0].mxu0
      %v1048 = vpop.f32.mrb[0].mxu0
      %v1049 = vpop.f32.mrb[0].mxu0
      %1050 = vdwg.mxu0
      %v1051 = vld [vmem:[%s6] sm:$0xf]
      %1053 = vset.pattern.permute.xlu0 0
      %1054 = vperm.xlu0 %1053, %v1051
      %v1055 = vpop.permute.xlu0 %1054
      %v1057 = vmul.f32 %v1005, %v1055
      %v1058 = vmul.f32 %v1007, %v1055
      %v1059 = vmul.f32 %v1046, %v1055
      %v1060 = vld [vmem:[%s7] sm:$0xf]
      %1062 = vset.pattern.permute.xlu0 0
      %1063 = vperm.xlu0 %1062, %v1060
      %v1064 = vpop.permute.xlu0 %1063
      %v1066 = vadd.f32 %v1057, %v1064
      %v1067 = vadd.f32 %v1058, %v1064
      %v1068 = vadd.f32 %v1059, %v1064
      %vm1069 = vcmp.ge.f32.partialorder %v1066, 0.0
      %vm1070 = vcmp.ge.f32.partialorder %v1067, 0.0
      %vm1071 = vcmp.ge.f32.partialorder %v1068, 0.0
      %v1072 = vmul.f32 %v1066, 0.01
      %v1073 = vmul.f32 %v1067, 0.01
      %v1074 = vmul.f32 %v1068, 0.01
      %v1075 = vsel %vm1069, %v1066, %v1072
      %v1076 = vsel %vm1070, %v1067, %v1073
      %v1077 = vsel %vm1071, %v1068, %v1074
      %v1078 = vmul.f32 %v1075, %v738
      %v1079 = vmul.f32 %v1076, %v742
      %v1080 = vmul.f32 %v1077, %v746
      %v1084 = vcombine.low %v1078, %v1079
      %1085 = vrot.lane.b32.xlu0 %v1084, 19
      %v1086 = vpop.permute.xlu0 %1085
      %1087 = vrot.lane.b32.xlu0 %v1080, 19
      %v1088 = vpop.permute.xlu0 %1087
      %v1089 = vrot.slane %v1086, 4
      %v1090 = vsel %vm401, %v1089, %v1086
      %v1091 = vsel %vm401, %v1089, %v1088
      %1094 = vst.msk [vmem:[#allocation2] sm:$0xff] %vm408, %v1090
      %1095 = vst.msk [vmem:[#allocation2 + $0x8] sm:$0xf] %vm410, %v1091
      %v1096 = vld [vmem:[#allocation2] sm:$0xff]
      %v1097 = vld [vmem:[#allocation2 + $0x8] sm:$0xf]
      %v1099 = vcombine.high %v1096, %v1096
      %1101 = vst [vmem:[#allocation3] sm:$0xf] %v1096
      %1102 = vst [vmem:[#allocation3 + $0x8] sm:$0xf] %v1099
      %1103 = vst.msk [vmem:[#allocation3 + $0x10] sm:$0xf] %vm419, %v1097
      %v1104 = vld [vmem:[#allocation2] sm:$0xff]
      %v1105 = vld [vmem:[#allocation2 + $0x8] sm:$0xf]
      %v1108 = vcombine.low %v1104, %v1104
      %v1109 = vcombine.low %v1105, %v1105
      %1110 = vrot.lane.b32.xlu0 %v1108, 127
      %v1111 = vpop.permute.xlu0 %1110
      %1112 = vrot.lane.b32.xlu0 %v1104, 127
      %v1113 = vpop.permute.xlu0 %1112
      %1114 = vrot.lane.b32.xlu0 %v1109, 127
      %v1115 = vpop.permute.xlu0 %1114
      %v1116 = vsel %vm433, %v1111, %v1113
      %v1117 = vsel %vm433, %v1113, %v1115
      %1121 = vst [vmem:[#allocation3] sm:$0xf0] %v1116
      %1122 = vst [vmem:[#allocation3 + $0x8] sm:$0xf0] %v1117
      %1123 = vst.msk [vmem:[#allocation3 + $0x10] sm:$0xf0] %vm441, %v1115
      %v1124 = vld [vmem:[#allocation2] sm:$0xff]
      %v1125 = vld [vmem:[#allocation2 + $0x8] sm:$0xf]
      %v1128 = vcombine.high %v1124, %v1124
      %1129 = vrot.lane.b32.xlu0 %v1124, 126
      %v1130 = vpop.permute.xlu0 %1129
      %1131 = vrot.lane.b32.xlu0 %v1128, 126
      %v1132 = vpop.permute.xlu0 %1131
      %1133 = vrot.lane.b32.xlu0 %v1125, 126
      %v1134 = vpop.permute.xlu0 %1133
      %v1135 = vsel %vm454, %v1130, %v1132
      %v1136 = vsel %vm454, %v1132, %v1134
      %1140 = vst [vmem:[#allocation3 + $0x18] sm:$0xf] %v1135
      %1141 = vst [vmem:[#allocation3 + $0x20] sm:$0xf] %v1136
      %1142 = vst.msk [vmem:[#allocation3 + $0x28] sm:$0xf] %vm419, %v1134
      %v1143 = vld [vmem:[#allocation2] sm:$0xff]
      %v1144 = vld [vmem:[#allocation2 + $0x8] sm:$0xf]
      %v1147 = vcombine.low %v1143, %v1143
      %v1148 = vcombine.low %v1144, %v1144
      %1149 = vrot.lane.b32.xlu0 %v1147, 110
      %v1150 = vpop.permute.xlu0 %1149
      %1151 = vrot.lane.b32.xlu0 %v1143, 110
      %v1152 = vpop.permute.xlu0 %1151
      %1153 = vrot.lane.b32.xlu0 %v1148, 110
      %v1154 = vpop.permute.xlu0 %1153
      %v1155 = vsel %vm475, %v1150, %v1152
      %v1156 = vsel %vm475, %v1152, %v1154
      %1160 = vst [vmem:[#allocation3 + $0x18] sm:$0xf0] %v1155
      %1161 = vst [vmem:[#allocation3 + $0x20] sm:$0xf0] %v1156
      %1162 = vst.msk [vmem:[#allocation3 + $0x28] sm:$0xf0] %vm441, %v1154
      %v1163 = vld [vmem:[#allocation2] sm:$0xff]
      %v1164 = vld [vmem:[#allocation2 + $0x8] sm:$0xf]
      %v1167 = vcombine.high %v1163, %v1163
      %1168 = vrot.lane.b32.xlu0 %v1163, 109
      %v1169 = vpop.permute.xlu0 %1168
      %1170 = vrot.lane.b32.xlu0 %v1167, 109
      %v1171 = vpop.permute.xlu0 %1170
      %1172 = vrot.lane.b32.xlu0 %v1164, 109
      %v1173 = vpop.permute.xlu0 %1172
      %v1174 = vsel %vm495, %v1169, %v1171
      %v1175 = vsel %vm495, %v1171, %v1173
      %1179 = vst [vmem:[#allocation3 + $0x30] sm:$0xf] %v1174
      %1180 = vst [vmem:[#allocation3 + $0x38] sm:$0xf] %v1175
      %1181 = vst.msk [vmem:[#allocation3 + $0x40] sm:$0xf] %vm419, %v1173
      %v1182 = vld [vmem:[#allocation2] sm:$0xff]
      %v1183 = vld [vmem:[#allocation2 + $0x8] sm:$0xf]
      %v1186 = vcombine.low %v1182, %v1182
      %v1187 = vcombine.low %v1183, %v1183
      %1188 = vrot.lane.b32.xlu0 %v1186, 108
      %v1189 = vpop.permute.xlu0 %1188
      %1190 = vrot.lane.b32.xlu0 %v1182, 108
      %v1191 = vpop.permute.xlu0 %1190
      %1192 = vrot.lane.b32.xlu0 %v1187, 108
      %v1193 = vpop.permute.xlu0 %1192
      %v1194 = vsel %vm516, %v1189, %v1191
      %v1195 = vsel %vm516, %v1191, %v1193
      %1199 = vst [vmem:[#allocation3 + $0x30] sm:$0xf0] %v1194
      %1200 = vst [vmem:[#allocation3 + $0x38] sm:$0xf0] %v1195
      %1201 = vst.msk [vmem:[#allocation3 + $0x40] sm:$0xf0] %vm441, %v1193
      %v1202 = vld [vmem:[#allocation2] sm:$0xff]
      %v1203 = vld [vmem:[#allocation2 + $0x8] sm:$0xf]
      %v1206 = vcombine.high %v1202, %v1202
      %1207 = vrot.lane.b32.xlu0 %v1202, 92
      %v1208 = vpop.permute.xlu0 %1207
      %1209 = vrot.lane.b32.xlu0 %v1206, 92
      %v1210 = vpop.permute.xlu0 %1209
      %1211 = vrot.lane.b32.xlu0 %v1203, 92
      %v1212 = vpop.permute.xlu0 %1211
      %v1213 = vsel %vm536, %v1208, %v1210
      %v1214 = vsel %vm536, %v1210, %v1212
      %1218 = vst [vmem:[#allocation3 + $0x48] sm:$0xf] %v1213
      %1219 = vst [vmem:[#allocation3 + $0x50] sm:$0xf] %v1214
      %1220 = vst.msk [vmem:[#allocation3 + $0x58] sm:$0xf] %vm419, %v1212
      %v1221 = vld [vmem:[#allocation2] sm:$0xff]
      %v1222 = vld [vmem:[#allocation2 + $0x8] sm:$0xf]
      %v1225 = vcombine.low %v1221, %v1221
      %v1226 = vcombine.low %v1222, %v1222
      %1227 = vrot.lane.b32.xlu0 %v1225, 91
      %v1228 = vpop.permute.xlu0 %1227
      %1229 = vrot.lane.b32.xlu0 %v1221, 91
      %v1230 = vpop.permute.xlu0 %1229
      %1231 = vrot.lane.b32.xlu0 %v1226, 91
      %v1232 = vpop.permute.xlu0 %1231
      %v1233 = vsel %vm557, %v1228, %v1230
      %v1234 = vsel %vm557, %v1230, %v1232
      %1238 = vst [vmem:[#allocation3 + $0x48] sm:$0xf0] %v1233
      %1239 = vst [vmem:[#allocation3 + $0x50] sm:$0xf0] %v1234
      %1240 = vst.msk [vmem:[#allocation3 + $0x58] sm:$0xf0] %vm441, %v1232
      %v1241 = vld [vmem:[#allocation2] sm:$0xff]
      %v1242 = vld [vmem:[#allocation2 + $0x8] sm:$0xf]
      %v1245 = vcombine.high %v1241, %v1241
      %1246 = vrot.lane.b32.xlu0 %v1241, 90
      %v1247 = vpop.permute.xlu0 %1246
      %1248 = vrot.lane.b32.xlu0 %v1245, 90
      %v1249 = vpop.permute.xlu0 %1248
      %1250 = vrot.lane.b32.xlu0 %v1242, 90
      %v1251 = vpop.permute.xlu0 %1250
      %v1252 = vsel %vm577, %v1247, %v1249
      %v1253 = vsel %vm577, %v1249, %v1251
      %1257 = vst [vmem:[#allocation3 + $0x60] sm:$0xf] %v1252
      %1258 = vst [vmem:[#allocation3 + $0x68] sm:$0xf] %v1253
      %1259 = vst.msk [vmem:[#allocation3 + $0x70] sm:$0xf] %vm419, %v1251
      %v1260 = vld [vmem:[#allocation3] sm:$0xff]
      %v1261 = vld [vmem:[#allocation3 + $0x8] sm:$0xff]
      %v1262 = vld [vmem:[#allocation3 + $0x10] sm:$0xff]
      %v1263 = vld [vmem:[#allocation3 + $0x18] sm:$0xff]
      %v1264 = vld [vmem:[#allocation3 + $0x20] sm:$0xff]
      %v1265 = vld [vmem:[#allocation3 + $0x28] sm:$0xff]
      %v1266 = vld [vmem:[#allocation3 + $0x30] sm:$0xff]
      %v1267 = vld [vmem:[#allocation3 + $0x38] sm:$0xff]
      %v1268 = vld [vmem:[#allocation3 + $0x40] sm:$0xff]
      %v1269 = vld [vmem:[#allocation3 + $0x48] sm:$0xff]
      %v1270 = vld [vmem:[#allocation3 + $0x50] sm:$0xff]
      %v1271 = vld [vmem:[#allocation3 + $0x58] sm:$0xff]
      %v1272 = vld [vmem:[#allocation3 + $0x60] sm:$0xf]
      %v1273 = vld [vmem:[#allocation3 + $0x68] sm:$0xf]
      %v1274 = vld [vmem:[#allocation3 + $0x70] sm:$0xf]
      %v1275 = vpack.c.bf16 %v1263, %v1260
      %v1276 = vpack.c.bf16 %v1264, %v1261
      %v1277 = vpack.c.bf16 %v1265, %v1262
      %v1278 = vpack.c.bf16 %v1269, %v1266
      %v1279 = vpack.c.bf16 %v1270, %v1267
      %v1280 = vpack.c.bf16 %v1271, %v1268
      %v1281 = vpack.c.bf16 %v1272, %v1272
      %v1282 = vpack.c.bf16 %v1273, %v1273
      %v1283 = vpack.c.bf16 %v1274, %v1274
      %v1284 = vld [vmem:[%s8] sm:$0xff]
      %v1285 = vpack.c.bf16 %v1284, %v1284
      %v1287 = vsel %vm612, %v1285, 0
      %v1290 = vsel %vm616, %v1281, 0
      %v1293 = vsel %vm616, %v1282, 0
      %v1296 = vsel %vm616, %v1283, 0
      %1298 = vmatprep.subr.bf16.mxu0 %v1276
      %1299 = vmatpush1.bf16.msra.mxu0 %v1275
      %1300 = vmatprep.subr.bf16.mxu0 %v1279
      %1301 = vmatpush1.bf16.msra.mxu0 %v1278
      %1302 = vmatprep.subr.bf16.mxu0 %v1293
      %1303 = vmatpush1.bf16.msra.mxu0 %v1290
      %1304 = vmatprep.subr.bf16.mxu0 0
      %1305 = vmatpush1.bf16.msra.mxu0 0
      %1306 = vmatprep.subr.bf16.mxu0 0
      %1307 = vmatpush1.bf16.msra.mxu0 0
      %1308 = vmatprep.subr.bf16.mxu0 0
      %1309 = vmatpush1.bf16.msra.mxu0 0
      %1310 = vmatprep.subr.bf16.mxu0 0
      %1311 = vmatpush1.bf16.msra.mxu0 0
      %1312 = vmatprep.subr.bf16.mxu0 0
      %1313 = vmatpush1.bf16.msra.mxu0 0
      %1314 = vmatprep.subr.bf16.mxu0 0
      %1315 = vmatpush1.bf16.msra.mxu0 0
      %1316 = vmatprep.subr.bf16.mxu0 0
      %1317 = vmatpush1.bf16.msra.mxu0 0
      %1318 = vmatprep.subr.bf16.mxu0 0
      %1319 = vmatpush1.bf16.msra.mxu0 0
      %1320 = vmatprep.subr.bf16.mxu0 0
      %1321 = vmatpush1.bf16.msra.mxu0 0
      %1322 = vmatprep.subr.bf16.mxu0 0
      %1323 = vmatpush1.bf16.msra.mxu0 0
      %1324 = vmatprep.subr.bf16.mxu0 0
      %1325 = vmatpush1.bf16.msra.mxu0 0
      %1326 = vmatprep.subr.bf16.mxu0 0
      %1327 = vmatpush1.bf16.msra.mxu0 0
      %1328 = vmatprep.subr.bf16.mxu0 0
      %1329 = vmatpush1.bf16.msra.mxu0 0
      %1330 = vmatprep.mubr.bf16.mxu0 0
      %1331 = vmatmul.mubr.bf16.gmra.mrb[0].mxu0 %v1287
      %v1332 = vpop.f32.mrb[0].mxu0
      %v1333 = vadd.f32 0.0, %v1332
      %v1334 = vpop.f32.mrb[0].mxu0
      %v1335 = vadd.f32 0.0, %v1334
      %v1336 = vpop.f32.mrb[0].mxu0
      %v1337 = vpop.f32.mrb[0].mxu0
      %1338 = vdwg.mxu0
      %1339 = vmatprep.subr.bf16.mxu0 0
      %1340 = vmatpush1.bf16.msra.mxu0 %v1277
      %1341 = vmatprep.subr.bf16.mxu0 0
      %1342 = vmatpush1.bf16.msra.mxu0 %v1280
      %1343 = vmatprep.subr.bf16.mxu0 0
      %1344 = vmatpush1.bf16.msra.mxu0 %v1296
      %1345 = vmatprep.subr.bf16.mxu0 0
      %1346 = vmatpush1.bf16.msra.mxu0 0
      %1347 = vmatprep.subr.bf16.mxu0 0
      %1348 = vmatpush1.bf16.msra.mxu0 0
      %1349 = vmatprep.subr.bf16.mxu0 0
      %1350 = vmatpush1.bf16.msra.mxu0 0
      %1351 = vmatprep.subr.bf16.mxu0 0
      %1352 = vmatpush1.bf16.msra.mxu0 0
      %1353 = vmatprep.subr.bf16.mxu0 0
      %1354 = vmatpush1.bf16.msra.mxu0 0
      %1355 = vmatprep.subr.bf16.mxu0 0
      %1356 = vmatpush1.bf16.msra.mxu0 0
      %1357 = vmatprep.subr.bf16.mxu0 0
      %1358 = vmatpush1.bf16.msra.mxu0 0
      %1359 = vmatprep.subr.bf16.mxu0 0
      %1360 = vmatpush1.bf16.msra.mxu0 0
      %1361 = vmatprep.subr.bf16.mxu0 0
      %1362 = vmatpush1.bf16.msra.mxu0 0
      %1363 = vmatprep.subr.bf16.mxu0 0
      %1364 = vmatpush1.bf16.msra.mxu0 0
      %1365 = vmatprep.subr.bf16.mxu0 0
      %1366 = vmatpush1.bf16.msra.mxu0 0
      %1367 = vmatprep.subr.bf16.mxu0 0
      %1368 = vmatpush1.bf16.msra.mxu0 0
      %1369 = vmatprep.subr.bf16.mxu0 0
      %1370 = vmatpush1.bf16.msra.mxu0 0
      %1371 = vmatprep.mubr.bf16.mxu0 0
      %1372 = vmatmul.mubr.bf16.gmra.mrb[0].mxu0 %v1287
      %v1373 = vpop.f32.mrb[0].mxu0
      %v1374 = vadd.f32 0.0, %v1373
      %v1375 = vpop.f32.mrb[0].mxu0
      %v1376 = vpop.f32.mrb[0].mxu0
      %v1377 = vpop.f32.mrb[0].mxu0
      %1378 = vdwg.mxu0
      %v1379 = vld [vmem:[%s9] sm:$0xff]
      %1381 = vset.pattern.permute.xlu0 0
      %1382 = vperm.xlu0 %1381, %v1379
      %v1383 = vpop.permute.xlu0 %1382
      %v1385 = vmul.f32 %v1333, %v1383
      %v1386 = vmul.f32 %v1335, %v1383
      %v1387 = vmul.f32 %v1374, %v1383
      %v1388 = vld [vmem:[%s10] sm:$0xff]
      %1390 = vset.pattern.permute.xlu0 0
      %1391 = vperm.xlu0 %1390, %v1388
      %v1392 = vpop.permute.xlu0 %1391
      %v1394 = vadd.f32 %v1385, %v1392
      %v1395 = vadd.f32 %v1386, %v1392
      %v1396 = vadd.f32 %v1387, %v1392
      %vm1397 = vcmp.ge.f32.partialorder %v1394, 0.0
      %vm1398 = vcmp.ge.f32.partialorder %v1395, 0.0
      %vm1399 = vcmp.ge.f32.partialorder %v1396, 0.0
      %v1400 = vmul.f32 %v1394, 0.01
      %v1401 = vmul.f32 %v1395, 0.01
      %v1402 = vmul.f32 %v1396, 0.01
      %v1403 = vsel %vm1397, %v1394, %v1400
      %v1404 = vsel %vm1398, %v1395, %v1401
      %v1405 = vsel %vm1399, %v1396, %v1402
      %v1406 = vmul.f32 %v1403, %v738
      %v1407 = vmul.f32 %v1404, %v742
      %v1408 = vmul.f32 %v1405, %v746
      %v1409 = vrot.slane %v1406, 4
      %v1410 = vmax.f32 %v1406, %v1409
      %v1411 = vrot.slane %v1410, 2
      %v1412 = vmax.f32 %v1410, %v1411
      %v1413 = vrot.slane %v1412, 1
      %v1414 = vmax.f32 %v1412, %v1413
      %v1415 = vrot.slane %v1407, 4
      %v1416 = vmax.f32 %v1407, %v1415
      %v1417 = vrot.slane %v1416, 2
      %v1418 = vmax.f32 %v1416, %v1417
      %v1419 = vrot.slane %v1418, 1
      %v1420 = vmax.f32 %v1418, %v1419
      %vm1421 = vcmask 556032
      %v1422 = vsel %vm1421, %v1408, -inf
      %v1423 = vrot.slane %v1422, 4
      %v1424 = vmax.f32 %v1422, %v1423
      %v1425 = vrot.slane %v1424, 2
      %v1426 = vmax.f32 %v1424, %v1425
      %v1427 = vrot.slane %v1426, 1
      %v1428 = vmax.f32 %v1426, %v1427
      %v1429 = vsub.f32 %v1406, %v1414
      %v1430 = vsub.f32 %v1407, %v1420
      %v1431 = vsub.f32 %v1408, %v1428
      %v1432 = vmul.f32 %v1429, 1.442695
      %v1433 = vpow.pop %v1432
      %v1434 = vmul.f32 %v1430, 1.442695
      %v1435 = vpow.pop %v1434
      %v1436 = vmul.f32 %v1431, 1.442695
      %v1437 = vpow.pop %v1436
      %v1438 = vrot.slane %v1433, 4
      %v1439 = vadd.f32 %v1433, %v1438
      %v1440 = vrot.slane %v1439, 2
      %v1441 = vadd.f32 %v1439, %v1440
      %v1442 = vrot.slane %v1441, 1
      %v1443 = vadd.f32 %v1441, %v1442
      %v1444 = vrot.slane %v1435, 4
      %v1445 = vadd.f32 %v1435, %v1444
      %v1446 = vrot.slane %v1445, 2
      %v1447 = vadd.f32 %v1445, %v1446
      %v1448 = vrot.slane %v1447, 1
      %v1449 = vadd.f32 %v1447, %v1448
      %v1450 = vsel %vm1421, %v1437, 0.0
      %v1451 = vrot.slane %v1450, 4
      %v1452 = vadd.f32 %v1450, %v1451
      %v1453 = vrot.slane %v1452, 2
      %v1454 = vadd.f32 %v1452, %v1453
      %v1455 = vrot.slane %v1454, 1
      %v1456 = vadd.f32 %v1454, %v1455
      %v1457 = vrcp.pop %v1443
      %v1458 = vmul.f32 %v1433, %v1457
      %v1459 = vrcp.pop %v1449
      %v1460 = vmul.f32 %v1435, %v1459
      %v1461 = vrcp.pop %v1456
      %v1462 = vmul.f32 %v1437, %v1461
      %1463 = vst [vmem:[%s386] sm:$0xff] %v1458
      %1464 = vst [vmem:[%s386 + $0x8] sm:$0xff] %v1460
      %1465 = vst.msk [vmem:[%s386 + $0x10] sm:$0xff] %vm1421, %v1462
      %p1466 = scmp.lt.s32.totalorder %s22, 1
      %s1467 = scalar_select %p1466, %s22, 1
      %s1468 = smul.addr %s1467, 3
      %s1469 = smul.addr %s1468, 8
      %s1470 = scalar_lea.vmem %s11, %s1469
      // Predicated region
      $region65: #{branch_forward.1} parent=63 // pred_check
        %p1471 = pneg %p276
      $region66: #{branch_forward.1} parent=63 // pred_check_branch
        %1473 = sbr.rel (%p1471) target = $region68
      $region67: #{branch_forward.1} parent=63 // pred_region
        _
      $region68: #{branch_forward.1} parent=63 // pred_fallthru
        _
    $region64: #{branch_forward.1} parent=5 // pred_fallthru
      _
    %p1474 = scmp.le.s32.totalorder 2, %s17
    // Predicated region
    $region69: #{branch_forward.1} parent=5 // pred_check
      %p1475 = pneg %p1474
    $region70: #{branch_forward.1} parent=5 // pred_check_branch
      %1477 = sbr.rel (%p1475) target = $region72
    $region71: #{branch_forward.1} parent=5 // pred_region
      %s1478 = ssub.s32 %s17, 2
      // Predicated region
      $region73: #{branch_forward.1} parent=71 // pred_check
        %p1479 = pneg %p282
      $region74: #{branch_forward.1} parent=71 // pred_check_branch
        %1481 = sbr.rel (%p1479) target = $region76
      $region75: #{branch_forward.1} parent=71 // pred_region
        %p1482 = scmp.lt.s32.totalorder %s23, 1
        %s1483 = scalar_select %p1482, %s23, 1
        %s1484 = smul.addr %s1483, 3
        %s1485 = smul.addr %s1484, 8
        %s1486 = scalar_lea.vmem %s11, %s1485
      $region76: #{branch_forward.1} parent=71 // pred_fallthru
        _
    $region72: #{branch_forward.1} parent=5 // pred_fallthru
      _
  $region6: #{branch_forward.1} parent=0 // loop_footer
    %s21 = sadd.s32 1, %s17
  $region7: #{branch_forward.1} parent=0 // loop_footer_branch
    %16 = sbr.rel target = $region3
  $region8: #{branch_forward.1} parent=0 // loop_exit
    _

</llo_original>
